<compile_context>
chip_gen: v7x
topology: tpu7x:2x2x1
jax: 0.10.0
libtpu: 0.0.40
codegen_flags: <defaults>
</compile_context>

<pallas_src>
import functools

import jax
import jax.numpy as jnp
from jax.experimental import pallas as pl
from jax.experimental.pallas import tpu as pltpu

NEG = -1e30  # "minus infinity" that stays finite through adds/matmuls (no NaN from 0*inf)


def _vmem_spec():
    return pl.BlockSpec(memory_space=pltpu.MemorySpace.VMEM)


# --------------------------------------------------------------------------
# in-kernel helpers
# --------------------------------------------------------------------------

def _gelu(x):
    # tanh-approx GELU (PyTorch nn.GELU default is the exact erf form; ~1e-3 difference)
    return 0.5 * x * (1.0 + jnp.tanh(0.7978845608028654 * (x + 0.044715 * x * x * x)))


def _layernorm(x, g, b, eps=1e-12):
    mu = jnp.mean(x, axis=-1, keepdims=True)
    var = jnp.mean((x - mu) ** 2, axis=-1, keepdims=True)
    return (x - mu) * jax.lax.rsqrt(var + eps) * g + b


def _first_argmax_last(x, keepdims=False):
    # first-occurrence argmax along the last axis, via max + iota (last-axis reduce only)
    mx = jnp.max(x, axis=-1, keepdims=True)
    iota = jax.lax.broadcasted_iota(jnp.int32, x.shape, x.ndim - 1)
    sentinel = jnp.int32(x.shape[-1])
    return jnp.min(jnp.where(x == mx, iota, sentinel), axis=-1, keepdims=keepdims)


def _logsumexp_last(x):
    m = jnp.max(x, axis=-1, keepdims=True)
    return jnp.log(jnp.sum(jnp.exp(x - m), axis=-1)) + m[..., 0]


# --------------------------------------------------------------------------
# fused encoder + emission-projection kernel (one grid step == one batch element)
# --------------------------------------------------------------------------

def _encoder_kernel(emb_ref, mask_ref,
                    ln0g_ref, ln0b_ref, wqkv_ref, bqkv_ref, wo_ref, bo_ref,
                    ln1g_ref, ln1b_ref, w1_ref, b1_ref, w2_ref, b2_ref,
                    ln2g_ref, ln2b_ref, ffw_ref, ffb_ref,
                    em_ref, ctx_ref, *, num_heads, head_dim, scale):
    S, H = emb_ref.shape

    # embedding LayerNorm
    x = _layernorm(emb_ref[...], ln0g_ref[...], ln0b_ref[...])                 # (S, H)

    # fused QKV projection: one (S,H) @ (H,3H) MXU issue instead of three
    qkv = jnp.dot(x, wqkv_ref[...], preferred_element_type=jnp.float32) + bqkv_ref[...]
    mask_bias = mask_ref[...].reshape(1, S)                                    # (1, S) additive

    # per-head self-attention, all in VMEM (no wrapper-side reshape/transpose)
    for h in range(num_heads):
        lo = h * head_dim
        q = qkv[:, lo:lo + head_dim]                                           # (S, dh)
        k = qkv[:, H + lo:H + lo + head_dim]
        v = qkv[:, 2 * H + lo:2 * H + lo + head_dim]
        s = jax.lax.dot_general(q, k, (((1,), (1,)), ((), ())),
                                preferred_element_type=jnp.float32) * scale    # (S, S)
        s = s + mask_bias
        m = jnp.max(s, axis=-1, keepdims=True)
        p = jnp.exp(s - m)
        denom = jnp.sum(p, axis=-1, keepdims=True)
        p = p * pl.reciprocal(denom, approx=True)                              # EUP, not VALU divide
        ctx_ref[:, lo:lo + head_dim] = jnp.dot(p, v, preferred_element_type=jnp.float32)

    attn = jnp.dot(ctx_ref[...], wo_ref[...], preferred_element_type=jnp.float32) + bo_ref[...]
    x = _layernorm(attn + x, ln1g_ref[...], ln1b_ref[...])

    # feed-forward
    hmid = _gelu(jnp.dot(x, w1_ref[...], preferred_element_type=jnp.float32) + b1_ref[...])
    ff = jnp.dot(hmid, w2_ref[...], preferred_element_type=jnp.float32) + b2_ref[...]
    x = _layernorm(ff + x, ln2g_ref[...], ln2b_ref[...])

    # emission projection, lane-padded to 128 classes -> single dense (S,128) store
    em_ref[...] = (jnp.dot(x, ffw_ref[...], preferred_element_type=jnp.float32)
                   + ffb_ref[...]).astype(em_ref.dtype)


def fused_encoder(emb2, mask_bias, params, num_heads):
    BS, H = emb2.shape
    B = mask_bias.shape[0]
    S = BS // B
    dh = H // num_heads
    Cpad = params["ffw_pad"].shape[1]

    weight_keys = ("ln0_g", "ln0_b", "wqkv", "bqkv", "wo", "bo", "ln1_g", "ln1_b",
                   "w1", "b1", "w2", "b2", "ln2_g", "ln2_b", "ffw_pad", "ffb_pad")
    weights = [params[k] for k in weight_keys]

    def full_spec(w):
        return pl.BlockSpec(w.shape, lambda b, _nd=w.ndim: (0,) * _nd)

    in_specs = ([pl.BlockSpec((S, H), lambda b: (b, 0)),            # one batch element's rows
                 pl.BlockSpec((1, 1, S), lambda b: (b, 0, 0))]       # its mask bias
                + [full_spec(w) for w in weights])

    return pl.pallas_call(
        functools.partial(_encoder_kernel, num_heads=num_heads, head_dim=dh,
                          scale=1.0 / (dh ** 0.5)),
        out_shape=jax.ShapeDtypeStruct((BS, Cpad), jnp.float32),
        grid=(B,),
        in_specs=in_specs,
        out_specs=pl.BlockSpec((S, Cpad), lambda b: (b, 0)),
        scratch_shapes=[pltpu.VMEM((S, H), jnp.float32)],
        compiler_params=pltpu.CompilerParams(dimension_semantics=("parallel",)),
    )(emb2, mask_bias, *weights)


# --------------------------------------------------------------------------
# CRF kernel: gold-path score + forward algorithm + Viterbi decode (class-padded)
# --------------------------------------------------------------------------

def _crf_kernel(em_ref, oh_ref, start_ref, end_ref, trans_ref, trans_t_ref,
                llh_ref, dec_ref, *, S):
    em = em_ref[...]            # (B, S, Cp)  padded class lanes have emission 0
    oh = oh_ref[...]            # (B, S, Cp)  one-hot of gold tags (0 in padded lanes)
    start = start_ref[...]      # (1, Cp)     padded lanes = NEG
    end = end_ref[...]          # (1, Cp)
    trans = trans_ref[...]      # (Cp, Cp)    trans[i, j]: i -> j ; padded rows/cols = NEG
    trans_t = trans_t_ref[...]  # (Cp, Cp)    trans_t[j, i] = trans[i, j]
    B, _, Cp = em.shape

    # ----- numerator: score of the gold tag sequence -----
    em_score = jnp.sum(jnp.sum(em * oh, axis=-1), axis=-1, keepdims=True)           # (B, 1)
    start_score = jnp.sum(oh[:, 0, :] * start, axis=-1, keepdims=True)              # (B, 1)
    end_score = jnp.sum(oh[:, S - 1, :] * end, axis=-1, keepdims=True)              # (B, 1)
    pt = jnp.einsum("btc,cd->btd", oh[:, :-1, :], trans,
                    preferred_element_type=jnp.float32)                             # (B, S-1, Cp)
    trans_score = jnp.sum(jnp.sum(pt * oh[:, 1:, :], axis=-1), axis=-1, keepdims=True)
    numerator = em_score + start_score + end_score + trans_score                    # (B, 1)

    # ----- denominator: forward algorithm (log partition) -----
    alpha = start + em[:, 0, :]                                                     # (B, Cp)
    for t in range(1, S):
        # y[b, j, i] = alpha[b, i] + trans[i, j]
        y = alpha[:, None, :] + trans_t[None, :, :]                                 # (B, Cp, Cp)
        alpha = _logsumexp_last(y) + em[:, t, :]
    zf = alpha + end
    mz = jnp.max(zf, axis=-1, keepdims=True)
    logZ = jnp.log(jnp.sum(jnp.exp(zf - mz), axis=-1, keepdims=True)) + mz          # (B, 1)

    # reduction='sum' in torchcrf: sum of per-sequence log-likelihoods
    llh_ref[...] = jnp.sum(numerator - logZ, axis=0, keepdims=True)                 # (1, 1)

    # ----- Viterbi decode -----
    score = start + em[:, 0, :]                                                     # (B, Cp)
    hist = []
    for t in range(1, S):
        y = score[:, None, :] + trans_t[None, :, :]                                 # (B, Cnext, Cprev)
        hist.append(_first_argmax_last(y))                                          # (B, Cp) int32
        score = jnp.max(y, axis=-1) + em[:, t, :]
    score = score + end
    last = _first_argmax_last(score, keepdims=True)                                 # (B, 1) int32

    # backtrack: accumulate the path in registers, single dense store at the end
    iota_c = jax.lax.broadcasted_iota(jnp.int32, (B, Cp), 1)
    col_s = jax.lax.broadcasted_iota(jnp.int32, (B, S), 1)
    dec = jnp.where(col_s == (S - 1), last, 0)                                      # (B, S)
    ind = (iota_c == last).astype(jnp.int32)                                        # (B, Cp)
    for t in range(S - 2, -1, -1):
        prev = jnp.sum(hist[t] * ind, axis=-1, keepdims=True)                       # (B, 1)
        dec = jnp.where(col_s == t, prev, dec)
        ind = (iota_c == prev).astype(jnp.int32)
    dec_ref[...] = dec.astype(jnp.int32)


def crf_forward_decode(emissions_pad, tags_onehot_pad, start_pad, end_pad, trans_pad):
    B, S, _ = emissions_pad.shape
    llh, dec = pl.pallas_call(
        functools.partial(_crf_kernel, S=S),
        out_shape=(jax.ShapeDtypeStruct((1, 1), jnp.float32),
                   jax.ShapeDtypeStruct((B, S), jnp.int32)),
        in_specs=[_vmem_spec()] * 6,
        out_specs=(_vmem_spec(), _vmem_spec()),
    )(emissions_pad, tags_onehot_pad, start_pad, end_pad, trans_pad,
      jnp.transpose(trans_pad))
    return llh[0, 0], dec


# --------------------------------------------------------------------------
# BertNER forward (synthetic single-layer BERT stand-in, deterministic weights)
# --------------------------------------------------------------------------

def bert_ner_forward(params, num_heads, num_classes, src, src_mask, segment, tags):
    B, S = src.shape
    H = params["word_emb"].shape[1]
    Cpad = params["ffw_pad"].shape[1]

    # embeddings (gathers stay in XLA; everything else is in the fused kernel)
    we = jnp.take(params["word_emb"], src, axis=0)                  # (B, S, H)
    pe = params["pos_emb"][:S][None, :, :]                          # (1, S, H)
    se = jnp.take(params["seg_emb"], segment, axis=0)               # (B, S, H)
    emb = (we + pe + se).reshape(B * S, H)

    mask_bias = ((1.0 - src_mask.astype(jnp.float32)) * (-1e9)).reshape(B, 1, S)

    # TODO(synk): nn.Dropout(0.1) is train-time RNG; forward here uses eval-mode identity.
    emissions_pad = fused_encoder(emb, mask_bias, params, num_heads)            # (B*S, Cpad)
    emissions_pad = emissions_pad.reshape(B, S, Cpad)

    # the spec calls self.crf(emissions, tags) / self.crf.decode(emissions) with NO mask
    tags_onehot = jax.nn.one_hot(tags, Cpad, dtype=jnp.float32)
    log_likelihood, sequence_of_tags = crf_forward_decode(
        emissions_pad, tags_onehot,
        params["crf_start_pad"], params["crf_end_pad"], params["crf_trans_pad"])

    emissions = emissions_pad[:, :, :num_classes]
    return log_likelihood, sequence_of_tags, emissions


# --------------------------------------------------------------------------
# deterministic parameter init + pure-JAX CRF reference (sanity check)
# --------------------------------------------------------------------------

def init_params(key, vocab, H, FF, S_max, C, Cpad=128, n_seg=2):
    ks = jax.random.split(key, 16)
    n = lambda k, shape, s=0.02: jax.random.normal(k, shape, jnp.float32) * s
    u = lambda k, shape: jax.random.uniform(k, shape, jnp.float32, -0.1, 0.1)

    wq, wk, wv = n(ks[3], (H, H)), n(ks[4], (H, H)), n(ks[5], (H, H))
    ff_w = n(ks[9], (H, C))
    crf_start = u(ks[10], (C,))
    crf_end = u(ks[11], (C,))
    crf_trans = u(ks[12], (C, C))

    return {
        "word_emb": n(ks[0], (vocab, H)),
        "pos_emb": n(ks[1], (S_max, H)),
        "seg_emb": n(ks[2], (n_seg, H)),
        "ln0_g": jnp.ones((1, H), jnp.float32), "ln0_b": jnp.zeros((1, H), jnp.float32),
        # fused QKV weight (H, 3H)
        "wqkv": jnp.concatenate([wq, wk, wv], axis=1),
        "bqkv": jnp.zeros((1, 3 * H), jnp.float32),
        "wo": n(ks[6], (H, H)), "bo": jnp.zeros((1, H), jnp.float32),
        "ln1_g": jnp.ones((1, H), jnp.float32), "ln1_b": jnp.zeros((1, H), jnp.float32),
        "w1": n(ks[7], (H, FF)), "b1": jnp.zeros((1, FF), jnp.float32),
        "w2": n(ks[8], (FF, H)), "b2": jnp.zeros((1, H), jnp.float32),
        "ln2_g": jnp.ones((1, H), jnp.float32), "ln2_b": jnp.zeros((1, H), jnp.float32),
        # position_wise_ff: Linear(H, C), lane-padded to (H, Cpad) with zero columns
        "ffw_pad": jnp.zeros((H, Cpad), jnp.float32).at[:, :C].set(ff_w),
        "ffb_pad": jnp.zeros((1, Cpad), jnp.float32),
        # CRF(num_tags=C): uniform(-0.1, 0.1) like torchcrf.reset_parameters;
        # padded classes are blocked off with a large negative (but finite) score
        "crf_start_pad": jnp.full((1, Cpad), NEG, jnp.float32).at[0, :C].set(crf_start),
        "crf_end_pad": jnp.full((1, Cpad), NEG, jnp.float32).at[0, :C].set(crf_end),
        "crf_trans_pad": jnp.full((Cpad, Cpad), NEG, jnp.float32).at[:C, :C].set(crf_trans),
        "crf_start": crf_start, "crf_end": crf_end, "crf_trans": crf_trans,
    }


def crf_reference(emissions, tags, start, end, trans):
    B, S, C = emissions.shape
    bi = jnp.arange(B)
    num = start[tags[:, 0]] + emissions[bi, 0, tags[:, 0]]
    for t in range(1, S):
        num = num + trans[tags[:, t - 1], tags[:, t]] + emissions[bi, t, tags[:, t]]
    num = num + end[tags[:, -1]]
    alpha = start[None] + emissions[:, 0]
    for t in range(1, S):
        alpha = jax.nn.logsumexp(alpha[:, :, None] + trans[None] + emissions[:, t][:, None, :], axis=1)
    logZ = jax.nn.logsumexp(alpha + end[None], axis=-1)
    llh = jnp.sum(num - logZ)
    score = start[None] + emissions[:, 0]
    hist = []
    for t in range(1, S):
        x = score[:, :, None] + trans[None]
        hist.append(jnp.argmax(x, axis=1))
        score = jnp.max(x, axis=1) + emissions[:, t]
    score = score + end[None]
    cur = jnp.argmax(score, axis=-1)
    path = [cur]
    for t in range(S - 2, -1, -1):
        cur = hist[t][bi, cur]
        path.insert(0, cur)
    return llh, jnp.stack(path, axis=1).astype(jnp.int32)


if __name__ == "__main__":
    B, S, H, nH, FF, C, V = 2, 8, 32, 2, 128, 5, 100

    key = jax.random.PRNGKey(0)
    kp, k1, k2 = jax.random.split(key, 3)
    params = init_params(kp, vocab=V, H=H, FF=FF, S_max=16, C=C)

    src = jax.random.randint(k1, (B, S), 0, V, dtype=jnp.int32)
    src_mask = jnp.ones((B, S), jnp.int32).at[1, S - 1].set(0)   # one padded position
    segment = jnp.zeros((B, S), jnp.int32)
    tags = jax.random.randint(k2, (B, S), 0, C, dtype=jnp.int32)

    log_likelihood, sequence_of_tags, emissions = bert_ner_forward(
        params, nH, C, src, src_mask, segment, tags)
    jax.block_until_ready((log_likelihood, sequence_of_tags))

    # sanity: CRF kernel vs pure-JAX CRF reference on the kernel's emissions
    llh_ref, dec_chk = crf_reference(emissions, tags, params["crf_start"],
                                     params["crf_end"], params["crf_trans"])
    assert jnp.isfinite(log_likelihood), log_likelihood
    assert jnp.allclose(log_likelihood, llh_ref, atol=1e-3, rtol=1e-3), (log_likelihood, llh_ref)
    assert jnp.array_equal(sequence_of_tags, dec_chk), (sequence_of_tags, dec_chk)

    print("KERNEL_OK")
</pallas_src>

<mosaic_0001>
module attributes {stable_mosaic.version = 11 : i64} {
  func.func @_encoder_kernel(%arg0: i32, %arg1: memref<8x32xf32, #tpu.memory_space<vmem>>, %arg2: memref<1x1x8xf32, #tpu.memory_space<vmem>>, %arg3: memref<1x32xf32, #tpu.memory_space<vmem>>, %arg4: memref<1x32xf32, #tpu.memory_space<vmem>>, %arg5: memref<32x96xf32, #tpu.memory_space<vmem>>, %arg6: memref<1x96xf32, #tpu.memory_space<vmem>>, %arg7: memref<32x32xf32, #tpu.memory_space<vmem>>, %arg8: memref<1x32xf32, #tpu.memory_space<vmem>>, %arg9: memref<1x32xf32, #tpu.memory_space<vmem>>, %arg10: memref<1x32xf32, #tpu.memory_space<vmem>>, %arg11: memref<32x128xf32, #tpu.memory_space<vmem>>, %arg12: memref<1x128xf32, #tpu.memory_space<vmem>>, %arg13: memref<128x32xf32, #tpu.memory_space<vmem>>, %arg14: memref<1x32xf32, #tpu.memory_space<vmem>>, %arg15: memref<1x32xf32, #tpu.memory_space<vmem>>, %arg16: memref<1x32xf32, #tpu.memory_space<vmem>>, %arg17: memref<32x128xf32, #tpu.memory_space<vmem>>, %arg18: memref<1x128xf32, #tpu.memory_space<vmem>>, %arg19: memref<8x128xf32, #tpu.memory_space<vmem>>, %arg20: memref<8x32xf32, #tpu.memory_space<vmem>>) attributes {dimension_semantics = [#tpu.dimension_semantics<parallel>], iteration_bounds = array<i64: 2>, scalar_prefetch = 0 : i64, scratch_operands = 1 : i64, tpu.core_type = #tpu.core_type<tc>, window_params = [{transform_indices = @transform_0, window_bounds = array<i64: 8, 32>}, {transform_indices = @transform_1, window_bounds = array<i64: 1, 1, 8>}, {pipeline_mode = #tpu.pipeline_mode<synchronous>, transform_indices = @transform_2, window_bounds = array<i64: 1, 32>}, {pipeline_mode = #tpu.pipeline_mode<synchronous>, transform_indices = @transform_3, window_bounds = array<i64: 1, 32>}, {pipeline_mode = #tpu.pipeline_mode<synchronous>, transform_indices = @transform_4, window_bounds = array<i64: 32, 96>}, {pipeline_mode = #tpu.pipeline_mode<synchronous>, transform_indices = @transform_5, window_bounds = array<i64: 1, 96>}, {pipeline_mode = #tpu.pipeline_mode<synchronous>, transform_indices = @transform_6, window_bounds = array<i64: 32, 32>}, {pipeline_mode = #tpu.pipeline_mode<synchronous>, transform_indices = @transform_7, window_bounds = array<i64: 1, 32>}, {pipeline_mode = #tpu.pipeline_mode<synchronous>, transform_indices = @transform_8, window_bounds = array<i64: 1, 32>}, {pipeline_mode = #tpu.pipeline_mode<synchronous>, transform_indices = @transform_9, window_bounds = array<i64: 1, 32>}, {pipeline_mode = #tpu.pipeline_mode<synchronous>, transform_indices = @transform_10, window_bounds = array<i64: 32, 128>}, {pipeline_mode = #tpu.pipeline_mode<synchronous>, transform_indices = @transform_11, window_bounds = array<i64: 1, 128>}, {pipeline_mode = #tpu.pipeline_mode<synchronous>, transform_indices = @transform_12, window_bounds = array<i64: 128, 32>}, {pipeline_mode = #tpu.pipeline_mode<synchronous>, transform_indices = @transform_13, window_bounds = array<i64: 1, 32>}, {pipeline_mode = #tpu.pipeline_mode<synchronous>, transform_indices = @transform_14, window_bounds = array<i64: 1, 32>}, {pipeline_mode = #tpu.pipeline_mode<synchronous>, transform_indices = @transform_15, window_bounds = array<i64: 1, 32>}, {pipeline_mode = #tpu.pipeline_mode<synchronous>, transform_indices = @transform_16, window_bounds = array<i64: 32, 128>}, {pipeline_mode = #tpu.pipeline_mode<synchronous>, transform_indices = @transform_17, window_bounds = array<i64: 1, 128>}, {transform_indices = @transform_18, window_bounds = array<i64: 8, 128>}]} {
    %c0 = arith.constant 0 : index
    %c0_0 = arith.constant 0 : index
    %0 = vector.load %arg1[%c0, %c0_0] : memref<8x32xf32, #tpu.memory_space<vmem>>, vector<8x32xf32>
    %c0_1 = arith.constant 0 : index
    %c0_2 = arith.constant 0 : index
    %1 = vector.load %arg3[%c0_1, %c0_2] : memref<1x32xf32, #tpu.memory_space<vmem>>, vector<1x32xf32>
    %c0_3 = arith.constant 0 : index
    %c0_4 = arith.constant 0 : index
    %2 = vector.load %arg4[%c0_3, %c0_4] : memref<1x32xf32, #tpu.memory_space<vmem>>, vector<1x32xf32>
    %cst = arith.constant dense<0.000000e+00> : vector<8xf32>
    %3 = vector.multi_reduction <add>, %0, %cst [1] : vector<8x32xf32> to vector<8xf32>
    %4 = vector.shape_cast %3 : vector<8xf32> to vector<8x1xf32>
    %cst_5 = arith.constant 3.200000e+01 : f32
    %5 = vector.broadcast %cst_5 : f32 to vector<8x1xf32>
    %6 = arith.divf %4, %5 : vector<8x1xf32>
    %7 = vector.broadcast %6 : vector<8x1xf32> to vector<8x32xf32>
    %8 = arith.subf %0, %7 : vector<8x32xf32>
    %9 = arith.mulf %8, %8 : vector<8x32xf32>
    %cst_6 = arith.constant dense<0.000000e+00> : vector<8xf32>
    %10 = vector.multi_reduction <add>, %9, %cst_6 [1] : vector<8x32xf32> to vector<8xf32>
    %11 = vector.shape_cast %10 : vector<8xf32> to vector<8x1xf32>
    %cst_7 = arith.constant 3.200000e+01 : f32
    %12 = vector.broadcast %cst_7 : f32 to vector<8x1xf32>
    %13 = arith.divf %11, %12 : vector<8x1xf32>
    %14 = vector.broadcast %6 : vector<8x1xf32> to vector<8x32xf32>
    %15 = arith.subf %0, %14 : vector<8x32xf32>
    %cst_8 = arith.constant 9.99999996E-13 : f32
    %16 = vector.broadcast %cst_8 : f32 to vector<8x1xf32>
    %17 = arith.addf %13, %16 : vector<8x1xf32>
    %18 = math.rsqrt %17 : vector<8x1xf32>
    %19 = vector.broadcast %18 : vector<8x1xf32> to vector<8x32xf32>
    %20 = arith.mulf %15, %19 : vector<8x32xf32>
    %21 = vector.broadcast %1 : vector<1x32xf32> to vector<8x32xf32>
    %22 = arith.mulf %20, %21 : vector<8x32xf32>
    %23 = vector.broadcast %2 : vector<1x32xf32> to vector<8x32xf32>
    %24 = arith.addf %22, %23 : vector<8x32xf32>
    %c0_9 = arith.constant 0 : index
    %c0_10 = arith.constant 0 : index
    %25 = vector.load %arg5[%c0_9, %c0_10] : memref<32x96xf32, #tpu.memory_space<vmem>>, vector<32x96xf32>
    %cst_11 = arith.constant dense<0.000000e+00> : vector<8x96xf32>
    %26 = tpu.matmul %24, %25, %cst_11 {dimension_numbers = #tpu.dot_dimension_numbers<[1], [0], [0], [1], [0, 0, 1, 1], [], []>} : vector<8x32xf32>, vector<32x96xf32>, vector<8x96xf32> -> vector<8x96xf32>
    %c0_12 = arith.constant 0 : index
    %c0_13 = arith.constant 0 : index
    %27 = vector.load %arg6[%c0_12, %c0_13] : memref<1x96xf32, #tpu.memory_space<vmem>>, vector<1x96xf32>
    %28 = vector.broadcast %27 : vector<1x96xf32> to vector<8x96xf32>
    %29 = arith.addf %26, %28 : vector<8x96xf32>
    %c0_14 = arith.constant 0 : index
    %c0_15 = arith.constant 0 : index
    %c0_16 = arith.constant 0 : index
    %30 = vector.load %arg2[%c0_14, %c0_15, %c0_16] : memref<1x1x8xf32, #tpu.memory_space<vmem>>, vector<1x1x8xf32>
    %31 = vector.shape_cast %30 : vector<1x1x8xf32> to vector<1x8xf32>
    %32 = vector.extract_strided_slice %29 {offsets = [0, 0], sizes = [8, 16], strides = [1, 1]} : vector<8x96xf32> to vector<8x16xf32>
    %33 = vector.extract_strided_slice %29 {offsets = [0, 32], sizes = [8, 16], strides = [1, 1]} : vector<8x96xf32> to vector<8x16xf32>
    %34 = vector.extract_strided_slice %29 {offsets = [0, 64], sizes = [8, 16], strides = [1, 1]} : vector<8x96xf32> to vector<8x16xf32>
    %cst_17 = arith.constant dense<0.000000e+00> : vector<8x8xf32>
    %35 = tpu.matmul %32, %33, %cst_17 {dimension_numbers = #tpu.dot_dimension_numbers<[1], [1], [0], [0], [0, 0, 1, 0], [], []>} : vector<8x16xf32>, vector<8x16xf32>, vector<8x8xf32> -> vector<8x8xf32>
    %cst_18 = arith.constant 2.500000e-01 : f32
    %36 = vector.broadcast %cst_18 : f32 to vector<8x8xf32>
    %37 = arith.mulf %35, %36 : vector<8x8xf32>
    %38 = vector.broadcast %31 : vector<1x8xf32> to vector<8x8xf32>
    %39 = arith.addf %37, %38 : vector<8x8xf32>
    %cst_19 = arith.constant dense<0xFF800000> : vector<8xf32>
    %40 = vector.multi_reduction <maximumf>, %39, %cst_19 [1] : vector<8x8xf32> to vector<8xf32>
    %41 = vector.shape_cast %40 : vector<8xf32> to vector<8x1xf32>
    %42 = vector.broadcast %41 : vector<8x1xf32> to vector<8x8xf32>
    %43 = arith.subf %39, %42 : vector<8x8xf32>
    %44 = math.exp %43 : vector<8x8xf32>
    %cst_20 = arith.constant dense<0.000000e+00> : vector<8xf32>
    %45 = vector.multi_reduction <add>, %44, %cst_20 [1] : vector<8x8xf32> to vector<8xf32>
    %46 = vector.shape_cast %45 : vector<8xf32> to vector<8x1xf32>
    %47 = tpu.reciprocal %46 {approx = true} : vector<8x1xf32> -> vector<8x1xf32>
    %48 = vector.broadcast %47 : vector<8x1xf32> to vector<8x8xf32>
    %49 = arith.mulf %44, %48 : vector<8x8xf32>
    %cst_21 = arith.constant dense<0.000000e+00> : vector<8x16xf32>
    %50 = tpu.matmul %49, %34, %cst_21 {dimension_numbers = #tpu.dot_dimension_numbers<[1], [0], [0], [1], [0, 0, 1, 1], [], []>} : vector<8x8xf32>, vector<8x16xf32>, vector<8x16xf32> -> vector<8x16xf32>
    %c0_22 = arith.constant 0 : index
    %c0_23 = arith.constant 0 : index
    %51 = vector.load %arg20[%c0_22, %c0_23] : memref<8x32xf32, #tpu.memory_space<vmem>>, vector<8x16xf32>
    tpu.vector_store %arg20[%c0_22, %c0_23], %50 {strides = array<i32>} : memref<8x32xf32, #tpu.memory_space<vmem>>, vector<8x16xf32>,
    %52 = vector.extract_strided_slice %29 {offsets = [0, 16], sizes = [8, 16], strides = [1, 1]} : vector<8x96xf32> to vector<8x16xf32>
    %53 = vector.extract_strided_slice %29 {offsets = [0, 48], sizes = [8, 16], strides = [1, 1]} : vector<8x96xf32> to vector<8x16xf32>
    %54 = vector.extract_strided_slice %29 {offsets = [0, 80], sizes = [8, 16], strides = [1, 1]} : vector<8x96xf32> to vector<8x16xf32>
    %cst_24 = arith.constant dense<0.000000e+00> : vector<8x8xf32>
    %55 = tpu.matmul %52, %53, %cst_24 {dimension_numbers = #tpu.dot_dimension_numbers<[1], [1], [0], [0], [0, 0, 1, 0], [], []>} : vector<8x16xf32>, vector<8x16xf32>, vector<8x8xf32> -> vector<8x8xf32>
    %cst_25 = arith.constant 2.500000e-01 : f32
    %56 = vector.broadcast %cst_25 : f32 to vector<8x8xf32>
    %57 = arith.mulf %55, %56 : vector<8x8xf32>
    %58 = vector.broadcast %31 : vector<1x8xf32> to vector<8x8xf32>
    %59 = arith.addf %57, %58 : vector<8x8xf32>
    %cst_26 = arith.constant dense<0xFF800000> : vector<8xf32>
    %60 = vector.multi_reduction <maximumf>, %59, %cst_26 [1] : vector<8x8xf32> to vector<8xf32>
    %61 = vector.shape_cast %60 : vector<8xf32> to vector<8x1xf32>
    %62 = vector.broadcast %61 : vector<8x1xf32> to vector<8x8xf32>
    %63 = arith.subf %59, %62 : vector<8x8xf32>
    %64 = math.exp %63 : vector<8x8xf32>
    %cst_27 = arith.constant dense<0.000000e+00> : vector<8xf32>
    %65 = vector.multi_reduction <add>, %64, %cst_27 [1] : vector<8x8xf32> to vector<8xf32>
    %66 = vector.shape_cast %65 : vector<8xf32> to vector<8x1xf32>
    %67 = tpu.reciprocal %66 {approx = true} : vector<8x1xf32> -> vector<8x1xf32>
    %68 = vector.broadcast %67 : vector<8x1xf32> to vector<8x8xf32>
    %69 = arith.mulf %64, %68 : vector<8x8xf32>
    %cst_28 = arith.constant dense<0.000000e+00> : vector<8x16xf32>
    %70 = tpu.matmul %69, %54, %cst_28 {dimension_numbers = #tpu.dot_dimension_numbers<[1], [0], [0], [1], [0, 0, 1, 1], [], []>} : vector<8x8xf32>, vector<8x16xf32>, vector<8x16xf32> -> vector<8x16xf32>
    %c0_29 = arith.constant 0 : index
    %c16 = arith.constant 16 : index
    %71 = vector.load %arg20[%c0_29, %c16] : memref<8x32xf32, #tpu.memory_space<vmem>>, vector<8x16xf32>
    tpu.vector_store %arg20[%c0_29, %c16], %70 {strides = array<i32>} : memref<8x32xf32, #tpu.memory_space<vmem>>, vector<8x16xf32>,
    %c0_30 = arith.constant 0 : index
    %c0_31 = arith.constant 0 : index
    %72 = vector.load %arg20[%c0_30, %c0_31] : memref<8x32xf32, #tpu.memory_space<vmem>>, vector<8x32xf32>
    %c0_32 = arith.constant 0 : index
    %c0_33 = arith.constant 0 : index
    %73 = vector.load %arg7[%c0_32, %c0_33] : memref<32x32xf32, #tpu.memory_space<vmem>>, vector<32x32xf32>
    %cst_34 = arith.constant dense<0.000000e+00> : vector<8x32xf32>
    %74 = tpu.matmul %72, %73, %cst_34 {dimension_numbers = #tpu.dot_dimension_numbers<[1], [0], [0], [1], [0, 0, 1, 1], [], []>} : vector<8x32xf32>, vector<32x32xf32>, vector<8x32xf32> -> vector<8x32xf32>
    %c0_35 = arith.constant 0 : index
    %c0_36 = arith.constant 0 : index
    %75 = vector.load %arg8[%c0_35, %c0_36] : memref<1x32xf32, #tpu.memory_space<vmem>>, vector<1x32xf32>
    %76 = vector.broadcast %75 : vector<1x32xf32> to vector<8x32xf32>
    %77 = arith.addf %74, %76 : vector<8x32xf32>
    %78 = arith.addf %77, %24 : vector<8x32xf32>
    %c0_37 = arith.constant 0 : index
    %c0_38 = arith.constant 0 : index
    %79 = vector.load %arg9[%c0_37, %c0_38] : memref<1x32xf32, #tpu.memory_space<vmem>>, vector<1x32xf32>
    %c0_39 = arith.constant 0 : index
    %c0_40 = arith.constant 0 : index
    %80 = vector.load %arg10[%c0_39, %c0_40] : memref<1x32xf32, #tpu.memory_space<vmem>>, vector<1x32xf32>
    %cst_41 = arith.constant dense<0.000000e+00> : vector<8xf32>
    %81 = vector.multi_reduction <add>, %78, %cst_41 [1] : vector<8x32xf32> to vector<8xf32>
    %82 = vector.shape_cast %81 : vector<8xf32> to vector<8x1xf32>
    %cst_42 = arith.constant 3.200000e+01 : f32
    %83 = vector.broadcast %cst_42 : f32 to vector<8x1xf32>
    %84 = arith.divf %82, %83 : vector<8x1xf32>
    %85 = vector.broadcast %84 : vector<8x1xf32> to vector<8x32xf32>
    %86 = arith.subf %78, %85 : vector<8x32xf32>
    %87 = arith.mulf %86, %86 : vector<8x32xf32>
    %cst_43 = arith.constant dense<0.000000e+00> : vector<8xf32>
    %88 = vector.multi_reduction <add>, %87, %cst_43 [1] : vector<8x32xf32> to vector<8xf32>
    %89 = vector.shape_cast %88 : vector<8xf32> to vector<8x1xf32>
    %cst_44 = arith.constant 3.200000e+01 : f32
    %90 = vector.broadcast %cst_44 : f32 to vector<8x1xf32>
    %91 = arith.divf %89, %90 : vector<8x1xf32>
    %92 = vector.broadcast %84 : vector<8x1xf32> to vector<8x32xf32>
    %93 = arith.subf %78, %92 : vector<8x32xf32>
    %cst_45 = arith.constant 9.99999996E-13 : f32
    %94 = vector.broadcast %cst_45 : f32 to vector<8x1xf32>
    %95 = arith.addf %91, %94 : vector<8x1xf32>
    %96 = math.rsqrt %95 : vector<8x1xf32>
    %97 = vector.broadcast %96 : vector<8x1xf32> to vector<8x32xf32>
    %98 = arith.mulf %93, %97 : vector<8x32xf32>
    %99 = vector.broadcast %79 : vector<1x32xf32> to vector<8x32xf32>
    %100 = arith.mulf %98, %99 : vector<8x32xf32>
    %101 = vector.broadcast %80 : vector<1x32xf32> to vector<8x32xf32>
    %102 = arith.addf %100, %101 : vector<8x32xf32>
    %c0_46 = arith.constant 0 : index
    %c0_47 = arith.constant 0 : index
    %103 = vector.load %arg11[%c0_46, %c0_47] : memref<32x128xf32, #tpu.memory_space<vmem>>, vector<32x128xf32>
    %cst_48 = arith.constant dense<0.000000e+00> : vector<8x128xf32>
    %104 = tpu.matmul %102, %103, %cst_48 {dimension_numbers = #tpu.dot_dimension_numbers<[1], [0], [0], [1], [0, 0, 1, 1], [], []>} : vector<8x32xf32>, vector<32x128xf32>, vector<8x128xf32> -> vector<8x128xf32>
    %c0_49 = arith.constant 0 : index
    %c0_50 = arith.constant 0 : index
    %105 = vector.load %arg12[%c0_49, %c0_50] : memref<1x128xf32, #tpu.memory_space<vmem>>, vector<1x128xf32>
    %106 = vector.broadcast %105 : vector<1x128xf32> to vector<8x128xf32>
    %107 = arith.addf %104, %106 : vector<8x128xf32>
    %cst_51 = arith.constant 5.000000e-01 : f32
    %108 = vector.broadcast %cst_51 : f32 to vector<8x128xf32>
    %109 = arith.mulf %108, %107 : vector<8x128xf32>
    %cst_52 = arith.constant 4.471500e-02 : f32
    %110 = vector.broadcast %cst_52 : f32 to vector<8x128xf32>
    %111 = arith.mulf %110, %107 : vector<8x128xf32>
    %112 = arith.mulf %111, %107 : vector<8x128xf32>
    %113 = arith.mulf %112, %107 : vector<8x128xf32>
    %114 = arith.addf %107, %113 : vector<8x128xf32>
    %cst_53 = arith.constant 0.797884583 : f32
    %115 = vector.broadcast %cst_53 : f32 to vector<8x128xf32>
    %116 = arith.mulf %115, %114 : vector<8x128xf32>
    %117 = math.tanh %116 : vector<8x128xf32>
    %cst_54 = arith.constant 1.000000e+00 : f32
    %118 = vector.broadcast %cst_54 : f32 to vector<8x128xf32>
    %119 = arith.addf %118, %117 : vector<8x128xf32>
    %120 = arith.mulf %109, %119 : vector<8x128xf32>
    %c0_55 = arith.constant 0 : index
    %c0_56 = arith.constant 0 : index
    %121 = vector.load %arg13[%c0_55, %c0_56] : memref<128x32xf32, #tpu.memory_space<vmem>>, vector<128x32xf32>
    %cst_57 = arith.constant dense<0.000000e+00> : vector<8x32xf32>
    %122 = tpu.matmul %120, %121, %cst_57 {dimension_numbers = #tpu.dot_dimension_numbers<[1], [0], [0], [1], [0, 0, 1, 1], [], []>} : vector<8x128xf32>, vector<128x32xf32>, vector<8x32xf32> -> vector<8x32xf32>
    %c0_58 = arith.constant 0 : index
    %c0_59 = arith.constant 0 : index
    %123 = vector.load %arg14[%c0_58, %c0_59] : memref<1x32xf32, #tpu.memory_space<vmem>>, vector<1x32xf32>
    %124 = vector.broadcast %123 : vector<1x32xf32> to vector<8x32xf32>
    %125 = arith.addf %122, %124 : vector<8x32xf32>
    %126 = arith.addf %125, %102 : vector<8x32xf32>
    %c0_60 = arith.constant 0 : index
    %c0_61 = arith.constant 0 : index
    %127 = vector.load %arg15[%c0_60, %c0_61] : memref<1x32xf32, #tpu.memory_space<vmem>>, vector<1x32xf32>
    %c0_62 = arith.constant 0 : index
    %c0_63 = arith.constant 0 : index
    %128 = vector.load %arg16[%c0_62, %c0_63] : memref<1x32xf32, #tpu.memory_space<vmem>>, vector<1x32xf32>
    %cst_64 = arith.constant dense<0.000000e+00> : vector<8xf32>
    %129 = vector.multi_reduction <add>, %126, %cst_64 [1] : vector<8x32xf32> to vector<8xf32>
    %130 = vector.shape_cast %129 : vector<8xf32> to vector<8x1xf32>
    %cst_65 = arith.constant 3.200000e+01 : f32
    %131 = vector.broadcast %cst_65 : f32 to vector<8x1xf32>
    %132 = arith.divf %130, %131 : vector<8x1xf32>
    %133 = vector.broadcast %132 : vector<8x1xf32> to vector<8x32xf32>
    %134 = arith.subf %126, %133 : vector<8x32xf32>
    %135 = arith.mulf %134, %134 : vector<8x32xf32>
    %cst_66 = arith.constant dense<0.000000e+00> : vector<8xf32>
    %136 = vector.multi_reduction <add>, %135, %cst_66 [1] : vector<8x32xf32> to vector<8xf32>
    %137 = vector.shape_cast %136 : vector<8xf32> to vector<8x1xf32>
    %cst_67 = arith.constant 3.200000e+01 : f32
    %138 = vector.broadcast %cst_67 : f32 to vector<8x1xf32>
    %139 = arith.divf %137, %138 : vector<8x1xf32>
    %140 = vector.broadcast %132 : vector<8x1xf32> to vector<8x32xf32>
    %141 = arith.subf %126, %140 : vector<8x32xf32>
    %cst_68 = arith.constant 9.99999996E-13 : f32
    %142 = vector.broadcast %cst_68 : f32 to vector<8x1xf32>
    %143 = arith.addf %139, %142 : vector<8x1xf32>
    %144 = math.rsqrt %143 : vector<8x1xf32>
    %145 = vector.broadcast %144 : vector<8x1xf32> to vector<8x32xf32>
    %146 = arith.mulf %141, %145 : vector<8x32xf32>
    %147 = vector.broadcast %127 : vector<1x32xf32> to vector<8x32xf32>
    %148 = arith.mulf %146, %147 : vector<8x32xf32>
    %149 = vector.broadcast %128 : vector<1x32xf32> to vector<8x32xf32>
    %150 = arith.addf %148, %149 : vector<8x32xf32>
    %c0_69 = arith.constant 0 : index
    %c0_70 = arith.constant 0 : index
    %151 = vector.load %arg17[%c0_69, %c0_70] : memref<32x128xf32, #tpu.memory_space<vmem>>, vector<32x128xf32>
    %cst_71 = arith.constant dense<0.000000e+00> : vector<8x128xf32>
    %152 = tpu.matmul %150, %151, %cst_71 {dimension_numbers = #tpu.dot_dimension_numbers<[1], [0], [0], [1], [0, 0, 1, 1], [], []>} : vector<8x32xf32>, vector<32x128xf32>, vector<8x128xf32> -> vector<8x128xf32>
    %c0_72 = arith.constant 0 : index
    %c0_73 = arith.constant 0 : index
    %153 = vector.load %arg18[%c0_72, %c0_73] : memref<1x128xf32, #tpu.memory_space<vmem>>, vector<1x128xf32>
    %154 = vector.broadcast %153 : vector<1x128xf32> to vector<8x128xf32>
    %155 = arith.addf %152, %154 : vector<8x128xf32>
    %c0_74 = arith.constant 0 : index
    %c0_75 = arith.constant 0 : index
    %156 = vector.load %arg19[%c0_74, %c0_75] : memref<8x128xf32, #tpu.memory_space<vmem>>, vector<8x128xf32>
    tpu.vector_store %arg19[%c0_74, %c0_75], %155 {strides = array<i32>} : memref<8x128xf32, #tpu.memory_space<vmem>>, vector<8x128xf32>,
    return
  }
  func.func @transform_0(%arg0: i32) -> (i32, i32) {
    %c0_i32 = arith.constant 0 : i32
    %c0_i32_0 = arith.constant 0 : i32
    return %arg0, %c0_i32 : i32, i32
  }
  func.func @transform_1(%arg0: i32) -> (i32, i32, i32) {
    %c0_i32 = arith.constant 0 : i32
    %c0_i32_0 = arith.constant 0 : i32
    %c0_i32_1 = arith.constant 0 : i32
    return %arg0, %c0_i32, %c0_i32_0 : i32, i32, i32
  }
  func.func @transform_2(%arg0: i32) -> (i32, i32) {
    %c0_i32 = arith.constant 0 : i32
    %c0_i32_0 = arith.constant 0 : i32
    %c0_i32_1 = arith.constant 0 : i32
    return %c0_i32, %c0_i32_0 : i32, i32
  }
  func.func @transform_3(%arg0: i32) -> (i32, i32) {
    %c0_i32 = arith.constant 0 : i32
    %c0_i32_0 = arith.constant 0 : i32
    %c0_i32_1 = arith.constant 0 : i32
    return %c0_i32, %c0_i32_0 : i32, i32
  }
  func.func @transform_4(%arg0: i32) -> (i32, i32) {
    %c0_i32 = arith.constant 0 : i32
    %c0_i32_0 = arith.constant 0 : i32
    %c0_i32_1 = arith.constant 0 : i32
    return %c0_i32, %c0_i32_0 : i32, i32
  }
  func.func @transform_5(%arg0: i32) -> (i32, i32) {
    %c0_i32 = arith.constant 0 : i32
    %c0_i32_0 = arith.constant 0 : i32
    %c0_i32_1 = arith.constant 0 : i32
    return %c0_i32, %c0_i32_0 : i32, i32
  }
  func.func @transform_6(%arg0: i32) -> (i32, i32) {
    %c0_i32 = arith.constant 0 : i32
    %c0_i32_0 = arith.constant 0 : i32
    %c0_i32_1 = arith.constant 0 : i32
    return %c0_i32, %c0_i32_0 : i32, i32
  }
  func.func @transform_7(%arg0: i32) -> (i32, i32) {
    %c0_i32 = arith.constant 0 : i32
    %c0_i32_0 = arith.constant 0 : i32
    %c0_i32_1 = arith.constant 0 : i32
    return %c0_i32, %c0_i32_0 : i32, i32
  }
  func.func @transform_8(%arg0: i32) -> (i32, i32) {
    %c0_i32 = arith.constant 0 : i32
    %c0_i32_0 = arith.constant 0 : i32
    %c0_i32_1 = arith.constant 0 : i32
    return %c0_i32, %c0_i32_0 : i32, i32
  }
  func.func @transform_9(%arg0: i32) -> (i32, i32) {
    %c0_i32 = arith.constant 0 : i32
    %c0_i32_0 = arith.constant 0 : i32
    %c0_i32_1 = arith.constant 0 : i32
    return %c0_i32, %c0_i32_0 : i32, i32
  }
  func.func @transform_10(%arg0: i32) -> (i32, i32) {
    %c0_i32 = arith.constant 0 : i32
    %c0_i32_0 = arith.constant 0 : i32
    %c0_i32_1 = arith.constant 0 : i32
    return %c0_i32, %c0_i32_0 : i32, i32
  }
  func.func @transform_11(%arg0: i32) -> (i32, i32) {
    %c0_i32 = arith.constant 0 : i32
    %c0_i32_0 = arith.constant 0 : i32
    %c0_i32_1 = arith.constant 0 : i32
    return %c0_i32, %c0_i32_0 : i32, i32
  }
  func.func @transform_12(%arg0: i32) -> (i32, i32) {
    %c0_i32 = arith.constant 0 : i32
    %c0_i32_0 = arith.constant 0 : i32
    %c0_i32_1 = arith.constant 0 : i32
    return %c0_i32, %c0_i32_0 : i32, i32
  }
  func.func @transform_13(%arg0: i32) -> (i32, i32) {
    %c0_i32 = arith.constant 0 : i32
    %c0_i32_0 = arith.constant 0 : i32
    %c0_i32_1 = arith.constant 0 : i32
    return %c0_i32, %c0_i32_0 : i32, i32
  }
  func.func @transform_14(%arg0: i32) -> (i32, i32) {
    %c0_i32 = arith.constant 0 : i32
    %c0_i32_0 = arith.constant 0 : i32
    %c0_i32_1 = arith.constant 0 : i32
    return %c0_i32, %c0_i32_0 : i32, i32
  }
  func.func @transform_15(%arg0: i32) -> (i32, i32) {
    %c0_i32 = arith.constant 0 : i32
    %c0_i32_0 = arith.constant 0 : i32
    %c0_i32_1 = arith.constant 0 : i32
    return %c0_i32, %c0_i32_0 : i32, i32
  }
  func.func @transform_16(%arg0: i32) -> (i32, i32) {
    %c0_i32 = arith.constant 0 : i32
    %c0_i32_0 = arith.constant 0 : i32
    %c0_i32_1 = arith.constant 0 : i32
    return %c0_i32, %c0_i32_0 : i32, i32
  }
  func.func @transform_17(%arg0: i32) -> (i32, i32) {
    %c0_i32 = arith.constant 0 : i32
    %c0_i32_0 = arith.constant 0 : i32
    %c0_i32_1 = arith.constant 0 : i32
    return %c0_i32, %c0_i32_0 : i32, i32
  }
  func.func @transform_18(%arg0: i32) -> (i32, i32) {
    %c0_i32 = arith.constant 0 : i32
    %c0_i32_0 = arith.constant 0 : i32
    return %arg0, %c0_i32 : i32, i32
  }
}

</mosaic_0001>

<llo_original>
// kernel: tpu_custom_call.1
$region0: #{tpu_custom_call.1}
  #allocation0 [shape = 'u32[]', space=smem, size = 0x4, offset = 0x4, fixed_abs, tag = 'smem constant byte address 0x4 - core index']
  #allocation1 [shape = 'u32[144,128]{1,0:T(1,128)}', space=vmem, size = 0x12000, scoped, tag = 'internal scratch']
  #allocation2 [shape = 'f32[8,32]{1,0:T(8,128)}', space=vmem, size = 0x1000, scoped, tag = 'scratch operand']
  %s0 = inlined_call_operand.vmem [shape: f32[16,32], index: 0, kind: input, shape index: {}]
  %s1 = inlined_call_operand.vmem [shape: f32[2,1,8], index: 1, kind: input, shape index: {}]
  %s2 = inlined_call_operand.vmem [shape: f32[1,32], index: 2, kind: input, shape index: {}]
  %s3 = inlined_call_operand.vmem [shape: f32[1,32], index: 3, kind: input, shape index: {}]
  %s4 = inlined_call_operand.vmem [shape: f32[32,96], index: 4, kind: input, shape index: {}]
  %s5 = inlined_call_operand.vmem [shape: f32[1,96], index: 5, kind: input, shape index: {}]
  %s6 = inlined_call_operand.vmem [shape: f32[32,32], index: 6, kind: input, shape index: {}]
  %s7 = inlined_call_operand.vmem [shape: f32[1,32], index: 7, kind: input, shape index: {}]
  %s8 = inlined_call_operand.vmem [shape: f32[1,32], index: 8, kind: input, shape index: {}]
  %s9 = inlined_call_operand.vmem [shape: f32[1,32], index: 9, kind: input, shape index: {}]
  %s10 = inlined_call_operand.vmem [shape: f32[32,128], index: 10, kind: input, shape index: {}]
  %s11 = inlined_call_operand.vmem [shape: f32[1,128], index: 11, kind: input, shape index: {}]
  %s12 = inlined_call_operand.vmem [shape: f32[128,32], index: 12, kind: input, shape index: {}]
  %s13 = inlined_call_operand.vmem [shape: f32[1,32], index: 13, kind: input, shape index: {}]
  %s14 = inlined_call_operand.vmem [shape: f32[1,32], index: 14, kind: input, shape index: {}]
  %s15 = inlined_call_operand.vmem [shape: f32[1,32], index: 15, kind: input, shape index: {}]
  %s16 = inlined_call_operand.vmem [shape: f32[32,128], index: 16, kind: input, shape index: {}]
  %s17 = inlined_call_operand.vmem [shape: f32[1,128], index: 17, kind: input, shape index: {}]
  %s18 = inlined_call_operand.hbm [shape: f32[16,128], index: 18, kind: output, shape index: {}]
  %s19 = sld [smem:[#allocation0]]
  $region105: #{tpu_custom_call.1} parent=0
    _
  %s21 = ssub.s32 1, %s19
  %s22 = scalar_select 0, %s21, %s19
  $region1: #{tpu_custom_call.1} parent=0
    #allocation3 [shape = 'u8[8192]{0}', space=vmem, size = 0x2000, scoped, tag = 'output window, operand 0']
    #allocation4 [shape = 's32[2]{0}', space=sflag, size = 0x8, scoped, tag = 'scoped memory for tpu_custom_call.1']
    %23 = vsyncpa [#allocation4], 0
    %s24 = scalar_lea.sflag [#allocation4], 1
    %25 = vsyncpa %s24, 0
    loop: start=0, step=1, limit=4
    $region2: #{tpu_custom_call.1} parent=1 // loop_pre_header
      _
    $region3: #{tpu_custom_call.1} parent=1 // loop_header
      %s27 = sphi 0, %s31
      %p28 = scmp.ge.s32.totalorder %s27, 4
      %s37 = sphi 0, %s39
      %s40 = sphi 0, %s37
      %s41 = sphi 0, %s40
      %s57 = sphi 0, %s41
      %s63 = sphi 0, %s65
      %s66 = sphi 0, %s63
      %s67 = sphi 0, %s66
      %s83 = sphi 0, %s67
      %s87 = sphi 0, %s87
      %s89 = sphi 0, %s87
      %s90 = sphi 0, %s89
      %s104 = sphi 0, %s90
      %s108 = sphi 0, %s108
      %s110 = sphi 0, %s108
      %s111 = sphi 0, %s110
      %s125 = sphi 0, %s111
      %s129 = sphi 0, %s129
      %s131 = sphi 0, %s129
      %s132 = sphi 0, %s131
      %s146 = sphi 0, %s132
      %s150 = sphi 0, %s150
      %s152 = sphi 0, %s150
      %s153 = sphi 0, %s152
      %s167 = sphi 0, %s153
      %s171 = sphi 0, %s171
      %s173 = sphi 0, %s171
      %s174 = sphi 0, %s173
      %s188 = sphi 0, %s174
      %s192 = sphi 0, %s192
      %s194 = sphi 0, %s192
      %s195 = sphi 0, %s194
      %s209 = sphi 0, %s195
      %s213 = sphi 0, %s213
      %s215 = sphi 0, %s213
      %s216 = sphi 0, %s215
      %s230 = sphi 0, %s216
      %s234 = sphi 0, %s234
      %s236 = sphi 0, %s234
      %s237 = sphi 0, %s236
      %s251 = sphi 0, %s237
      %s255 = sphi 0, %s255
      %s257 = sphi 0, %s255
      %s258 = sphi 0, %s257
      %s272 = sphi 0, %s258
      %s276 = sphi 0, %s276
      %s278 = sphi 0, %s276
      %s279 = sphi 0, %s278
      %s293 = sphi 0, %s279
      %s297 = sphi 0, %s297
      %s299 = sphi 0, %s297
      %s300 = sphi 0, %s299
      %s314 = sphi 0, %s300
      %s318 = sphi 0, %s318
      %s320 = sphi 0, %s318
      %s321 = sphi 0, %s320
      %s335 = sphi 0, %s321
      %s339 = sphi 0, %s339
      %s341 = sphi 0, %s339
      %s342 = sphi 0, %s341
      %s356 = sphi 0, %s342
      %s360 = sphi 0, %s360
      %s362 = sphi 0, %s360
      %s363 = sphi 0, %s362
      %s377 = sphi 0, %s363
      %s381 = sphi 0, %s381
      %s383 = sphi 0, %s381
      %s384 = sphi 0, %s383
      %s398 = sphi 0, %s384
      %s402 = sphi 0, %s402
      %s404 = sphi 0, %s402
      %s405 = sphi 0, %s404
      %s419 = sphi 0, %s405
      %s425 = sphi 0, %s427
      %s428 = sphi 0, %s425
      %s429 = sphi 0, %s428
      %s445 = sphi 0, %s429
    $region4: #{tpu_custom_call.1} parent=1 // loop_header_branch
      %30 = sbr.rel (%p28) target = $region8
    $region5: #{tpu_custom_call.1} parent=1 // loop_body
      %s32 = ssub.s32 %s27, 1
      %s33 = ssub.s32 %s27, 2
      %s34 = sadd.s32 %s27, 1
      %s35 = ssub.s32 %s27, %s34
      %p36 = scmp.eq.s32.totalorder %s35, 0
      %s38 = sadd.s32 %s37, 1
      %s39 = scalar_select %p36, %s37, %s38
      %p42 = pneg %p36
      %p43 = scmp.eq.s32.totalorder %s27, 1
      %p44 = por %p42, %p43
      %p45 = scmp.ne.s32.totalorder %s37, %s40
      %p46 = scmp.eq.s32.totalorder %s27, 0
      %p47 = por %p45, %p46
      %p48 = scmp.ne.s32.totalorder %s37, %s40
      %p49 = scmp.eq.s32.totalorder %s32, 1
      %p50 = por %p48, %p49
      %p51 = scmp.ne.s32.totalorder %s40, %s41
      %p52 = scmp.eq.s32.totalorder %s32, 0
      %p53 = por %p51, %p52
      %p54 = scmp.ne.s32.totalorder %s40, %s41
      %p55 = scmp.eq.s32.totalorder %s33, 1
      %p56 = por %p54, %p55
      %p58 = scmp.ne.s32.totalorder %s41, %s57
      %p59 = scmp.eq.s32.totalorder %s33, 0
      %p60 = por %p58, %p59
      %s61 = ssub.s32 %s27, %s34
      %p62 = scmp.eq.s32.totalorder %s61, 0
      %s64 = sadd.s32 %s63, 1
      %s65 = scalar_select %p62, %s63, %s64
      %p68 = pneg %p62
      %p69 = scmp.eq.s32.totalorder %s27, 1
      %p70 = por %p68, %p69
      %p71 = scmp.ne.s32.totalorder %s63, %s66
      %p72 = scmp.eq.s32.totalorder %s27, 0
      %p73 = por %p71, %p72
      %p74 = scmp.ne.s32.totalorder %s63, %s66
      %p75 = scmp.eq.s32.totalorder %s32, 1
      %p76 = por %p74, %p75
      %p77 = scmp.ne.s32.totalorder %s66, %s67
      %p78 = scmp.eq.s32.totalorder %s32, 0
      %p79 = por %p77, %p78
      %p80 = scmp.ne.s32.totalorder %s66, %s67
      %p81 = scmp.eq.s32.totalorder %s33, 1
      %p82 = por %p80, %p81
      %p84 = scmp.ne.s32.totalorder %s67, %s83
      %p85 = scmp.eq.s32.totalorder %s33, 0
      %p86 = por %p84, %p85
      %s88 = sadd.s32 %s87, 1
      %p91 = scmp.eq.s32.totalorder %s27, 1
      %p92 = scmp.ne.s32.totalorder %s87, %s89
      %p93 = scmp.eq.s32.totalorder %s27, 0
      %p94 = por %p92, %p93
      %p95 = scmp.ne.s32.totalorder %s87, %s89
      %p96 = scmp.eq.s32.totalorder %s32, 1
      %p97 = por %p95, %p96
      %p98 = scmp.ne.s32.totalorder %s89, %s90
      %p99 = scmp.eq.s32.totalorder %s32, 0
      %p100 = por %p98, %p99
      %p101 = scmp.ne.s32.totalorder %s89, %s90
      %p102 = scmp.eq.s32.totalorder %s33, 1
      %p103 = por %p101, %p102
      %p105 = scmp.ne.s32.totalorder %s90, %s104
      %p106 = scmp.eq.s32.totalorder %s33, 0
      %p107 = por %p105, %p106
      %s109 = sadd.s32 %s108, 1
      %p112 = scmp.eq.s32.totalorder %s27, 1
      %p113 = scmp.ne.s32.totalorder %s108, %s110
      %p114 = scmp.eq.s32.totalorder %s27, 0
      %p115 = por %p113, %p114
      %p116 = scmp.ne.s32.totalorder %s108, %s110
      %p117 = scmp.eq.s32.totalorder %s32, 1
      %p118 = por %p116, %p117
      %p119 = scmp.ne.s32.totalorder %s110, %s111
      %p120 = scmp.eq.s32.totalorder %s32, 0
      %p121 = por %p119, %p120
      %p122 = scmp.ne.s32.totalorder %s110, %s111
      %p123 = scmp.eq.s32.totalorder %s33, 1
      %p124 = por %p122, %p123
      %p126 = scmp.ne.s32.totalorder %s111, %s125
      %p127 = scmp.eq.s32.totalorder %s33, 0
      %p128 = por %p126, %p127
      %s130 = sadd.s32 %s129, 1
      %p133 = scmp.eq.s32.totalorder %s27, 1
      %p134 = scmp.ne.s32.totalorder %s129, %s131
      %p135 = scmp.eq.s32.totalorder %s27, 0
      %p136 = por %p134, %p135
      %p137 = scmp.ne.s32.totalorder %s129, %s131
      %p138 = scmp.eq.s32.totalorder %s32, 1
      %p139 = por %p137, %p138
      %p140 = scmp.ne.s32.totalorder %s131, %s132
      %p141 = scmp.eq.s32.totalorder %s32, 0
      %p142 = por %p140, %p141
      %p143 = scmp.ne.s32.totalorder %s131, %s132
      %p144 = scmp.eq.s32.totalorder %s33, 1
      %p145 = por %p143, %p144
      %p147 = scmp.ne.s32.totalorder %s132, %s146
      %p148 = scmp.eq.s32.totalorder %s33, 0
      %p149 = por %p147, %p148
      %s151 = sadd.s32 %s150, 1
      %p154 = scmp.eq.s32.totalorder %s27, 1
      %p155 = scmp.ne.s32.totalorder %s150, %s152
      %p156 = scmp.eq.s32.totalorder %s27, 0
      %p157 = por %p155, %p156
      %p158 = scmp.ne.s32.totalorder %s150, %s152
      %p159 = scmp.eq.s32.totalorder %s32, 1
      %p160 = por %p158, %p159
      %p161 = scmp.ne.s32.totalorder %s152, %s153
      %p162 = scmp.eq.s32.totalorder %s32, 0
      %p163 = por %p161, %p162
      %p164 = scmp.ne.s32.totalorder %s152, %s153
      %p165 = scmp.eq.s32.totalorder %s33, 1
      %p166 = por %p164, %p165
      %p168 = scmp.ne.s32.totalorder %s153, %s167
      %p169 = scmp.eq.s32.totalorder %s33, 0
      %p170 = por %p168, %p169
      %s172 = sadd.s32 %s171, 1
      %p175 = scmp.eq.s32.totalorder %s27, 1
      %p176 = scmp.ne.s32.totalorder %s171, %s173
      %p177 = scmp.eq.s32.totalorder %s27, 0
      %p178 = por %p176, %p177
      %p179 = scmp.ne.s32.totalorder %s171, %s173
      %p180 = scmp.eq.s32.totalorder %s32, 1
      %p181 = por %p179, %p180
      %p182 = scmp.ne.s32.totalorder %s173, %s174
      %p183 = scmp.eq.s32.totalorder %s32, 0
      %p184 = por %p182, %p183
      %p185 = scmp.ne.s32.totalorder %s173, %s174
      %p186 = scmp.eq.s32.totalorder %s33, 1
      %p187 = por %p185, %p186
      %p189 = scmp.ne.s32.totalorder %s174, %s188
      %p190 = scmp.eq.s32.totalorder %s33, 0
      %p191 = por %p189, %p190
      %s193 = sadd.s32 %s192, 1
      %p196 = scmp.eq.s32.totalorder %s27, 1
      %p197 = scmp.ne.s32.totalorder %s192, %s194
      %p198 = scmp.eq.s32.totalorder %s27, 0
      %p199 = por %p197, %p198
      %p200 = scmp.ne.s32.totalorder %s192, %s194
      %p201 = scmp.eq.s32.totalorder %s32, 1
      %p202 = por %p200, %p201
      %p203 = scmp.ne.s32.totalorder %s194, %s195
      %p204 = scmp.eq.s32.totalorder %s32, 0
      %p205 = por %p203, %p204
      %p206 = scmp.ne.s32.totalorder %s194, %s195
      %p207 = scmp.eq.s32.totalorder %s33, 1
      %p208 = por %p206, %p207
      %p210 = scmp.ne.s32.totalorder %s195, %s209
      %p211 = scmp.eq.s32.totalorder %s33, 0
      %p212 = por %p210, %p211
      %s214 = sadd.s32 %s213, 1
      %p217 = scmp.eq.s32.totalorder %s27, 1
      %p218 = scmp.ne.s32.totalorder %s213, %s215
      %p219 = scmp.eq.s32.totalorder %s27, 0
      %p220 = por %p218, %p219
      %p221 = scmp.ne.s32.totalorder %s213, %s215
      %p222 = scmp.eq.s32.totalorder %s32, 1
      %p223 = por %p221, %p222
      %p224 = scmp.ne.s32.totalorder %s215, %s216
      %p225 = scmp.eq.s32.totalorder %s32, 0
      %p226 = por %p224, %p225
      %p227 = scmp.ne.s32.totalorder %s215, %s216
      %p228 = scmp.eq.s32.totalorder %s33, 1
      %p229 = por %p227, %p228
      %p231 = scmp.ne.s32.totalorder %s216, %s230
      %p232 = scmp.eq.s32.totalorder %s33, 0
      %p233 = por %p231, %p232
      %s235 = sadd.s32 %s234, 1
      %p238 = scmp.eq.s32.totalorder %s27, 1
      %p239 = scmp.ne.s32.totalorder %s234, %s236
      %p240 = scmp.eq.s32.totalorder %s27, 0
      %p241 = por %p239, %p240
      %p242 = scmp.ne.s32.totalorder %s234, %s236
      %p243 = scmp.eq.s32.totalorder %s32, 1
      %p244 = por %p242, %p243
      %p245 = scmp.ne.s32.totalorder %s236, %s237
      %p246 = scmp.eq.s32.totalorder %s32, 0
      %p247 = por %p245, %p246
      %p248 = scmp.ne.s32.totalorder %s236, %s237
      %p249 = scmp.eq.s32.totalorder %s33, 1
      %p250 = por %p248, %p249
      %p252 = scmp.ne.s32.totalorder %s237, %s251
      %p253 = scmp.eq.s32.totalorder %s33, 0
      %p254 = por %p252, %p253
      %s256 = sadd.s32 %s255, 1
      %p259 = scmp.eq.s32.totalorder %s27, 1
      %p260 = scmp.ne.s32.totalorder %s255, %s257
      %p261 = scmp.eq.s32.totalorder %s27, 0
      %p262 = por %p260, %p261
      %p263 = scmp.ne.s32.totalorder %s255, %s257
      %p264 = scmp.eq.s32.totalorder %s32, 1
      %p265 = por %p263, %p264
      %p266 = scmp.ne.s32.totalorder %s257, %s258
      %p267 = scmp.eq.s32.totalorder %s32, 0
      %p268 = por %p266, %p267
      %p269 = scmp.ne.s32.totalorder %s257, %s258
      %p270 = scmp.eq.s32.totalorder %s33, 1
      %p271 = por %p269, %p270
      %p273 = scmp.ne.s32.totalorder %s258, %s272
      %p274 = scmp.eq.s32.totalorder %s33, 0
      %p275 = por %p273, %p274
      %s277 = sadd.s32 %s276, 1
      %p280 = scmp.eq.s32.totalorder %s27, 1
      %p281 = scmp.ne.s32.totalorder %s276, %s278
      %p282 = scmp.eq.s32.totalorder %s27, 0
      %p283 = por %p281, %p282
      %p284 = scmp.ne.s32.totalorder %s276, %s278
      %p285 = scmp.eq.s32.totalorder %s32, 1
      %p286 = por %p284, %p285
      %p287 = scmp.ne.s32.totalorder %s278, %s279
      %p288 = scmp.eq.s32.totalorder %s32, 0
      %p289 = por %p287, %p288
      %p290 = scmp.ne.s32.totalorder %s278, %s279
      %p291 = scmp.eq.s32.totalorder %s33, 1
      %p292 = por %p290, %p291
      %p294 = scmp.ne.s32.totalorder %s279, %s293
      %p295 = scmp.eq.s32.totalorder %s33, 0
      %p296 = por %p294, %p295
      %s298 = sadd.s32 %s297, 1
      %p301 = scmp.eq.s32.totalorder %s27, 1
      %p302 = scmp.ne.s32.totalorder %s297, %s299
      %p303 = scmp.eq.s32.totalorder %s27, 0
      %p304 = por %p302, %p303
      %p305 = scmp.ne.s32.totalorder %s297, %s299
      %p306 = scmp.eq.s32.totalorder %s32, 1
      %p307 = por %p305, %p306
      %p308 = scmp.ne.s32.totalorder %s299, %s300
      %p309 = scmp.eq.s32.totalorder %s32, 0
      %p310 = por %p308, %p309
      %p311 = scmp.ne.s32.totalorder %s299, %s300
      %p312 = scmp.eq.s32.totalorder %s33, 1
      %p313 = por %p311, %p312
      %p315 = scmp.ne.s32.totalorder %s300, %s314
      %p316 = scmp.eq.s32.totalorder %s33, 0
      %p317 = por %p315, %p316
      %s319 = sadd.s32 %s318, 1
      %p322 = scmp.eq.s32.totalorder %s27, 1
      %p323 = scmp.ne.s32.totalorder %s318, %s320
      %p324 = scmp.eq.s32.totalorder %s27, 0
      %p325 = por %p323, %p324
      %p326 = scmp.ne.s32.totalorder %s318, %s320
      %p327 = scmp.eq.s32.totalorder %s32, 1
      %p328 = por %p326, %p327
      %p329 = scmp.ne.s32.totalorder %s320, %s321
      %p330 = scmp.eq.s32.totalorder %s32, 0
      %p331 = por %p329, %p330
      %p332 = scmp.ne.s32.totalorder %s320, %s321
      %p333 = scmp.eq.s32.totalorder %s33, 1
      %p334 = por %p332, %p333
      %p336 = scmp.ne.s32.totalorder %s321, %s335
      %p337 = scmp.eq.s32.totalorder %s33, 0
      %p338 = por %p336, %p337
      %s340 = sadd.s32 %s339, 1
      %p343 = scmp.eq.s32.totalorder %s27, 1
      %p344 = scmp.ne.s32.totalorder %s339, %s341
      %p345 = scmp.eq.s32.totalorder %s27, 0
      %p346 = por %p344, %p345
      %p347 = scmp.ne.s32.totalorder %s339, %s341
      %p348 = scmp.eq.s32.totalorder %s32, 1
      %p349 = por %p347, %p348
      %p350 = scmp.ne.s32.totalorder %s341, %s342
      %p351 = scmp.eq.s32.totalorder %s32, 0
      %p352 = por %p350, %p351
      %p353 = scmp.ne.s32.totalorder %s341, %s342
      %p354 = scmp.eq.s32.totalorder %s33, 1
      %p355 = por %p353, %p354
      %p357 = scmp.ne.s32.totalorder %s342, %s356
      %p358 = scmp.eq.s32.totalorder %s33, 0
      %p359 = por %p357, %p358
      %s361 = sadd.s32 %s360, 1
      %p364 = scmp.eq.s32.totalorder %s27, 1
      %p365 = scmp.ne.s32.totalorder %s360, %s362
      %p366 = scmp.eq.s32.totalorder %s27, 0
      %p367 = por %p365, %p366
      %p368 = scmp.ne.s32.totalorder %s360, %s362
      %p369 = scmp.eq.s32.totalorder %s32, 1
      %p370 = por %p368, %p369
      %p371 = scmp.ne.s32.totalorder %s362, %s363
      %p372 = scmp.eq.s32.totalorder %s32, 0
      %p373 = por %p371, %p372
      %p374 = scmp.ne.s32.totalorder %s362, %s363
      %p375 = scmp.eq.s32.totalorder %s33, 1
      %p376 = por %p374, %p375
      %p378 = scmp.ne.s32.totalorder %s363, %s377
      %p379 = scmp.eq.s32.totalorder %s33, 0
      %p380 = por %p378, %p379
      %s382 = sadd.s32 %s381, 1
      %p385 = scmp.eq.s32.totalorder %s27, 1
      %p386 = scmp.ne.s32.totalorder %s381, %s383
      %p387 = scmp.eq.s32.totalorder %s27, 0
      %p388 = por %p386, %p387
      %p389 = scmp.ne.s32.totalorder %s381, %s383
      %p390 = scmp.eq.s32.totalorder %s32, 1
      %p391 = por %p389, %p390
      %p392 = scmp.ne.s32.totalorder %s383, %s384
      %p393 = scmp.eq.s32.totalorder %s32, 0
      %p394 = por %p392, %p393
      %p395 = scmp.ne.s32.totalorder %s383, %s384
      %p396 = scmp.eq.s32.totalorder %s33, 1
      %p397 = por %p395, %p396
      %p399 = scmp.ne.s32.totalorder %s384, %s398
      %p400 = scmp.eq.s32.totalorder %s33, 0
      %p401 = por %p399, %p400
      %s403 = sadd.s32 %s402, 1
      %p406 = scmp.eq.s32.totalorder %s27, 1
      %p407 = scmp.ne.s32.totalorder %s402, %s404
      %p408 = scmp.eq.s32.totalorder %s27, 0
      %p409 = por %p407, %p408
      %p410 = scmp.ne.s32.totalorder %s402, %s404
      %p411 = scmp.eq.s32.totalorder %s32, 1
      %p412 = por %p410, %p411
      %p413 = scmp.ne.s32.totalorder %s404, %s405
      %p414 = scmp.eq.s32.totalorder %s32, 0
      %p415 = por %p413, %p414
      %p416 = scmp.ne.s32.totalorder %s404, %s405
      %p417 = scmp.eq.s32.totalorder %s33, 1
      %p418 = por %p416, %p417
      %p420 = scmp.ne.s32.totalorder %s405, %s419
      %p421 = scmp.eq.s32.totalorder %s33, 0
      %p422 = por %p420, %p421
      %s423 = ssub.s32 %s27, %s34
      %p424 = scmp.eq.s32.totalorder %s423, 0
      %s426 = sadd.s32 %s425, 1
      %s427 = scalar_select %p424, %s425, %s426
      %p430 = pneg %p424
      %p431 = scmp.eq.s32.totalorder %s27, 1
      %p432 = por %p430, %p431
      %p433 = scmp.ne.s32.totalorder %s425, %s428
      %p434 = scmp.eq.s32.totalorder %s27, 0
      %p435 = por %p433, %p434
      %p436 = scmp.ne.s32.totalorder %s425, %s428
      %p437 = scmp.eq.s32.totalorder %s32, 1
      %p438 = por %p436, %p437
      %p439 = scmp.ne.s32.totalorder %s428, %s429
      %p440 = scmp.eq.s32.totalorder %s32, 0
      %p441 = por %p439, %p440
      %p442 = scmp.ne.s32.totalorder %s428, %s429
      %p443 = scmp.eq.s32.totalorder %s33, 1
      %p444 = por %p442, %p443
      %p446 = scmp.ne.s32.totalorder %s429, %s445
      %p447 = scmp.eq.s32.totalorder %s33, 0
      %p448 = por %p446, %p447
      %p449 = scmp.le.s32.totalorder 1, %s27
      %p450 = scmp.lt.s32.totalorder %s27, 3
      %p451 = pnand %p449, %p450
      %p452 = pneg %p451
      // Predicated region
      $region9: #{tpu_custom_call.1} parent=5 // pred_check
        _
      $region10: #{tpu_custom_call.1} parent=5 // pred_check_branch
        %454 = sbr.rel (%p451) target = $region12
      $region11: #{tpu_custom_call.1} parent=5 // pred_region
        %s455 = ssub.s32 %s27, 1
        // Predicated region
        $region13: #{tpu_custom_call.1} parent=11 // pred_check
          %p456 = pneg %p100
        $region14: #{tpu_custom_call.1} parent=11 // pred_check_branch
          %458 = sbr.rel (%p456) target = $region16
        $region15: #{tpu_custom_call.1} parent=11 // pred_region
          _
        $region16: #{tpu_custom_call.1} parent=11 // pred_fallthru
          _
        // Predicated region
        $region17: #{tpu_custom_call.1} parent=11 // pred_check
          %p459 = pneg %p121
        $region18: #{tpu_custom_call.1} parent=11 // pred_check_branch
          %461 = sbr.rel (%p459) target = $region20
        $region19: #{tpu_custom_call.1} parent=11 // pred_region
          _
        $region20: #{tpu_custom_call.1} parent=11 // pred_fallthru
          _
        // Predicated region
        $region21: #{tpu_custom_call.1} parent=11 // pred_check
          %p462 = pneg %p142
        $region22: #{tpu_custom_call.1} parent=11 // pred_check_branch
          %464 = sbr.rel (%p462) target = $region24
        $region23: #{tpu_custom_call.1} parent=11 // pred_region
          _
        $region24: #{tpu_custom_call.1} parent=11 // pred_fallthru
          _
        // Predicated region
        $region25: #{tpu_custom_call.1} parent=11 // pred_check
          %p465 = pneg %p163
        $region26: #{tpu_custom_call.1} parent=11 // pred_check_branch
          %467 = sbr.rel (%p465) target = $region28
        $region27: #{tpu_custom_call.1} parent=11 // pred_region
          _
        $region28: #{tpu_custom_call.1} parent=11 // pred_fallthru
          _
        // Predicated region
        $region29: #{tpu_custom_call.1} parent=11 // pred_check
          %p468 = pneg %p184
        $region30: #{tpu_custom_call.1} parent=11 // pred_check_branch
          %470 = sbr.rel (%p468) target = $region32
        $region31: #{tpu_custom_call.1} parent=11 // pred_region
          _
        $region32: #{tpu_custom_call.1} parent=11 // pred_fallthru
          _
        // Predicated region
        $region33: #{tpu_custom_call.1} parent=11 // pred_check
          %p471 = pneg %p205
        $region34: #{tpu_custom_call.1} parent=11 // pred_check_branch
          %473 = sbr.rel (%p471) target = $region36
        $region35: #{tpu_custom_call.1} parent=11 // pred_region
          _
        $region36: #{tpu_custom_call.1} parent=11 // pred_fallthru
          _
        // Predicated region
        $region37: #{tpu_custom_call.1} parent=11 // pred_check
          %p474 = pneg %p226
        $region38: #{tpu_custom_call.1} parent=11 // pred_check_branch
          %476 = sbr.rel (%p474) target = $region40
        $region39: #{tpu_custom_call.1} parent=11 // pred_region
          _
        $region40: #{tpu_custom_call.1} parent=11 // pred_fallthru
          _
        // Predicated region
        $region41: #{tpu_custom_call.1} parent=11 // pred_check
          %p477 = pneg %p247
        $region42: #{tpu_custom_call.1} parent=11 // pred_check_branch
          %479 = sbr.rel (%p477) target = $region44
        $region43: #{tpu_custom_call.1} parent=11 // pred_region
          _
        $region44: #{tpu_custom_call.1} parent=11 // pred_fallthru
          _
        // Predicated region
        $region45: #{tpu_custom_call.1} parent=11 // pred_check
          %p480 = pneg %p268
        $region46: #{tpu_custom_call.1} parent=11 // pred_check_branch
          %482 = sbr.rel (%p480) target = $region48
        $region47: #{tpu_custom_call.1} parent=11 // pred_region
          _
        $region48: #{tpu_custom_call.1} parent=11 // pred_fallthru
          _
        // Predicated region
        $region49: #{tpu_custom_call.1} parent=11 // pred_check
          %p483 = pneg %p289
        $region50: #{tpu_custom_call.1} parent=11 // pred_check_branch
          %485 = sbr.rel (%p483) target = $region52
        $region51: #{tpu_custom_call.1} parent=11 // pred_region
          _
        $region52: #{tpu_custom_call.1} parent=11 // pred_fallthru
          _
        // Predicated region
        $region53: #{tpu_custom_call.1} parent=11 // pred_check
          %p486 = pneg %p310
        $region54: #{tpu_custom_call.1} parent=11 // pred_check_branch
          %488 = sbr.rel (%p486) target = $region56
        $region55: #{tpu_custom_call.1} parent=11 // pred_region
          _
        $region56: #{tpu_custom_call.1} parent=11 // pred_fallthru
          _
        // Predicated region
        $region57: #{tpu_custom_call.1} parent=11 // pred_check
          %p489 = pneg %p331
        $region58: #{tpu_custom_call.1} parent=11 // pred_check_branch
          %491 = sbr.rel (%p489) target = $region60
        $region59: #{tpu_custom_call.1} parent=11 // pred_region
          _
        $region60: #{tpu_custom_call.1} parent=11 // pred_fallthru
          _
        // Predicated region
        $region61: #{tpu_custom_call.1} parent=11 // pred_check
          %p492 = pneg %p352
        $region62: #{tpu_custom_call.1} parent=11 // pred_check_branch
          %494 = sbr.rel (%p492) target = $region64
        $region63: #{tpu_custom_call.1} parent=11 // pred_region
          _
        $region64: #{tpu_custom_call.1} parent=11 // pred_fallthru
          _
        // Predicated region
        $region65: #{tpu_custom_call.1} parent=11 // pred_check
          %p495 = pneg %p373
        $region66: #{tpu_custom_call.1} parent=11 // pred_check_branch
          %497 = sbr.rel (%p495) target = $region68
        $region67: #{tpu_custom_call.1} parent=11 // pred_region
          _
        $region68: #{tpu_custom_call.1} parent=11 // pred_fallthru
          _
        // Predicated region
        $region69: #{tpu_custom_call.1} parent=11 // pred_check
          %p498 = pneg %p394
        $region70: #{tpu_custom_call.1} parent=11 // pred_check_branch
          %500 = sbr.rel (%p498) target = $region72
        $region71: #{tpu_custom_call.1} parent=11 // pred_region
          _
        $region72: #{tpu_custom_call.1} parent=11 // pred_fallthru
          _
        // Predicated region
        $region73: #{tpu_custom_call.1} parent=11 // pred_check
          %p501 = pneg %p415
        $region74: #{tpu_custom_call.1} parent=11 // pred_check_branch
          %503 = sbr.rel (%p501) target = $region76
        $region75: #{tpu_custom_call.1} parent=11 // pred_region
          _
        $region76: #{tpu_custom_call.1} parent=11 // pred_fallthru
          _
      $region12: #{tpu_custom_call.1} parent=5 // pred_fallthru
        _
      %p504 = scmp.lt.s32.totalorder %s27, 2
      // Predicated region
      $region77: #{tpu_custom_call.1} parent=5 // pred_check
        %p505 = pneg %p504
      $region78: #{tpu_custom_call.1} parent=5 // pred_check_branch
        %507 = sbr.rel (%p505) target = $region80
      $region79: #{tpu_custom_call.1} parent=5 // pred_region
        // Predicated region
        $region81: #{tpu_custom_call.1} parent=79 // pred_check
          %p508 = pneg %p47
        $region82: #{tpu_custom_call.1} parent=79 // pred_check_branch
          %510 = sbr.rel (%p508) target = $region84
        $region83: #{tpu_custom_call.1} parent=79 // pred_region
          %p511 = scmp.lt.s32.totalorder %s27, 1
          %s512 = scalar_select %p511, %s27, 1
          %s513 = smul.addr %s512, 8
          %s514 = scalar_lea.vmem %s0, %s513
        $region84: #{tpu_custom_call.1} parent=79 // pred_fallthru
          _
        // Predicated region
        $region85: #{tpu_custom_call.1} parent=79 // pred_check
          %p515 = pneg %p73
        $region86: #{tpu_custom_call.1} parent=79 // pred_check_branch
          %517 = sbr.rel (%p515) target = $region88
        $region87: #{tpu_custom_call.1} parent=79 // pred_region
          %p518 = scmp.lt.s32.totalorder %s27, 1
          %s519 = scalar_select %p518, %s27, 1
          %s520 = scalar_lea.vmem %s1, %s519
        $region88: #{tpu_custom_call.1} parent=79 // pred_fallthru
          _
      $region80: #{tpu_custom_call.1} parent=5 // pred_fallthru
        _
      %p521 = scmp.le.s32.totalorder 1, %s27
      %p522 = scmp.lt.s32.totalorder %s27, 3
      %p523 = pnand %p521, %p522
      %p524 = pneg %p523
      // Predicated region
      $region89: #{tpu_custom_call.1} parent=5 // pred_check
        _
      $region90: #{tpu_custom_call.1} parent=5 // pred_check_branch
        %526 = sbr.rel (%p523) target = $region92
      $region91: #{tpu_custom_call.1} parent=5 // pred_region
        %s527 = ssub.s32 %s27, 1
        %p528 = scmp.lt.s32.totalorder %s32, 1
        %s529 = scalar_select %p528, %s32, 1
        %s530 = smul.addr %s529, 8
        %s531 = scalar_lea.vmem %s0, %s530
        %p532 = pneg %p53
        %p533 = pneg %p50
        %p534 = scmp.lt.s32.totalorder %s32, 1
        %s535 = scalar_select %p534, %s32, 1
        %s536 = scalar_lea.vmem %s1, %s535
        %p537 = pneg %p79
        %p538 = pneg %p76
        %p539 = pneg %p100
        %p540 = pneg %p97
        %p541 = pneg %p121
        %p542 = pneg %p118
        %p543 = pneg %p142
        %p544 = pneg %p139
        %p545 = pneg %p163
        %p546 = pneg %p160
        %p547 = pneg %p184
        %p548 = pneg %p181
        %p549 = pneg %p205
        %p550 = pneg %p202
        %p551 = pneg %p226
        %p552 = pneg %p223
        %p553 = pneg %p247
        %p554 = pneg %p244
        %p555 = pneg %p268
        %p556 = pneg %p265
        %p557 = pneg %p289
        %p558 = pneg %p286
        %p559 = pneg %p310
        %p560 = pneg %p307
        %p561 = pneg %p331
        %p562 = pneg %p328
        %p563 = pneg %p352
        %p564 = pneg %p349
        %p565 = pneg %p373
        %p566 = pneg %p370
        %p567 = pneg %p394
        %p568 = pneg %p391
        %p569 = pneg %p415
        %p570 = pneg %p412
        %p571 = pneg %p441
        %p572 = pneg %p438
        %s573 = sand.u32 %s428, 1
        %s574 = scalar_lea.sflag [#allocation4], %s573
        %s575 = sand.u32 %s428, 1
        %s576 = smul.addr %s575, 8
        %s577 = scalar_lea.vmem [#allocation3], %s576
        %p578 = scmp.lt.s32.totalorder %s32, 1
        %s579 = scalar_select %p578, %s32, 1
        %s580 = smul.addr %s579, 8
        %s581 = scalar_lea.vmem %s0, %s580
        %p582 = scmp.lt.s32.totalorder %s32, 1
        %s583 = scalar_select %p582, %s32, 1
        %s584 = scalar_lea.vmem %s1, %s583
        %v585 = vld [vmem:[%s581] sm:$0xff]
        %v586 = vld [vmem:[%s2] sm:$0x1]
        %v587 = vld [vmem:[%s3] sm:$0x1]
        %vm588 = vcmask 261120
        %v589 = vsel %vm588, %v585, 0.0
        %590 = vadd.xlane.f32.xlu0 %v589
        %v591 = vpop.xlane.xlu0 %590
        %v592 = vrcp.pop 32.0
        %v593 = vmul.f32 %v591, %v592
        %v594 = vsub.f32 %v585, %v593
        %v595 = vmul.f32 %v594, %v594
        %v596 = vsel %vm588, %v595, 0.0
        %597 = vadd.xlane.f32.xlu0 %v596
        %v598 = vpop.xlane.xlu0 %597
        %v599 = vmul.f32 %v598, %v592
        %v600 = vadd.f32 %v599, 1e-12
        %v601 = vrsqrt.pop %v600
        %v602 = vmul.f32 %v594, %v601
        %v604 = vlaneseq
        %v605 = vshrl.u32 %v604, 7
        %v606 = vsub.s32 0, %v605
        %v607 = vrot.slane %v586, %v606
        %v609 = vmul.f32 %v602, %v607
        %v611 = vlaneseq
        %v612 = vshrl.u32 %v611, 7
        %v613 = vsub.s32 0, %v612
        %v614 = vrot.slane %v587, %v613
        %v616 = vadd.f32 %v609, %v614
        %v617 = vld [vmem:[%s4] sm:$0xff]
        %v618 = vld [vmem:[%s4 + $0x8] sm:$0xff]
        %v619 = vld [vmem:[%s4 + $0x10] sm:$0xff]
        %v620 = vld [vmem:[%s4 + $0x18] sm:$0xff]
        %v621 = vld [vmem:[%s5] sm:$0x1]
        %v623 = vlaneseq
        %v624 = vshrl.u32 %v623, 7
        %v625 = vsub.s32 0, %v624
        %v626 = vrot.slane %v621, %v625
        %v629 = vsel %vm588, %v616, 0
        %631 = vmatprep.subr.mxu0 0.0
        %632 = vmatpush1.msra.mxu0 %v617
        %633 = vmatprep.subr.mxu0 0.0
        %634 = vmatpush1.msra.mxu0 %v618
        %635 = vmatprep.subr.mxu0 0.0
        %636 = vmatpush1.msra.mxu0 %v619
        %637 = vmatprep.subr.mxu0 0.0
        %638 = vmatpush1.msra.mxu0 %v620
        %639 = vmatprep.subr.mxu0 0.0
        %640 = vmatpush1.msra.mxu0 0.0
        %641 = vmatprep.subr.mxu0 0.0
        %642 = vmatpush1.msra.mxu0 0.0
        %643 = vmatprep.subr.mxu0 0.0
        %644 = vmatpush1.msra.mxu0 0.0
        %645 = vmatprep.subr.mxu0 0.0
        %646 = vmatpush1.msra.mxu0 0.0
        %647 = vmatprep.subr.mxu0 0.0
        %648 = vmatpush1.msra.mxu0 0.0
        %649 = vmatprep.subr.mxu0 0.0
        %650 = vmatpush1.msra.mxu0 0.0
        %651 = vmatprep.subr.mxu0 0.0
        %652 = vmatpush1.msra.mxu0 0.0
        %653 = vmatprep.subr.mxu0 0.0
        %654 = vmatpush1.msra.mxu0 0.0
        %655 = vmatprep.subr.mxu0 0.0
        %656 = vmatpush1.msra.mxu0 0.0
        %657 = vmatprep.subr.mxu0 0.0
        %658 = vmatpush1.msra.mxu0 0.0
        %659 = vmatprep.subr.mxu0 0.0
        %660 = vmatpush1.msra.mxu0 0.0
        %661 = vmatprep.subr.mxu0 0.0
        %662 = vmatpush1.msra.mxu0 0.0
        %663 = vmatprep.subr.mxu0 0.0
        %664 = vmatpush1.msra.mxu0 0.0
        %665 = vmatprep.subr.mxu0 0.0
        %666 = vmatpush1.msra.mxu0 0.0
        %667 = vmatprep.subr.mxu0 0.0
        %668 = vmatpush1.msra.mxu0 0.0
        %669 = vmatprep.subr.mxu0 0.0
        %670 = vmatpush1.msra.mxu0 0.0
        %671 = vmatprep.subr.mxu0 0.0
        %672 = vmatpush1.msra.mxu0 0.0
        %673 = vmatprep.subr.mxu0 0.0
        %674 = vmatpush1.msra.mxu0 0.0
        %675 = vmatprep.subr.mxu0 0.0
        %676 = vmatpush1.msra.mxu0 0.0
        %677 = vmatprep.subr.mxu0 0.0
        %678 = vmatpush1.msra.mxu0 0.0
        %679 = vmatprep.subr.mxu0 0.0
        %680 = vmatpush1.msra.mxu0 0.0
        %681 = vmatprep.subr.mxu0 0.0
        %682 = vmatpush1.msra.mxu0 0.0
        %683 = vmatprep.subr.mxu0 0.0
        %684 = vmatpush1.msra.mxu0 0.0
        %685 = vmatprep.subr.mxu0 0.0
        %686 = vmatpush1.msra.mxu0 0.0
        %687 = vmatprep.subr.mxu0 0.0
        %688 = vmatpush1.msra.mxu0 0.0
        %689 = vmatprep.subr.mxu0 0.0
        %690 = vmatpush1.msra.mxu0 0.0
        %691 = vmatprep.subr.mxu0 0.0
        %692 = vmatpush1.msra.mxu0 0.0
        %693 = vmatprep.subr.mxu0 0.0
        %694 = vmatpush1.msra.mxu0 0.0
        %695 = vmatprep.mubr.f32.mxu0 0.0
        %696 = vmatmul.mubr.f32.gmra.mrb[0].mxu0 %v629
        %v697 = vpop.f32.mrb[0].mxu0
        %v698 = vadd.f32 %v626, %v697
        %v699 = vpop.f32.mrb[0].mxu0
        %700 = vdwg.mxu0
        %v701 = vld [vmem:[%s584] sm:$0x1]
        %703 = vrot.lane.b32.xlu0 %v698, 96
        %v704 = vpop.permute.xlu0 %703
        %vm705 = vcmask 130048
        %v706 = vsel %vm705, %v698, 0
        %v708 = vsel %vm705, %v704, 0
        %710 = vmatprep.subr.mxu0 0.0
        %711 = vmatpush1.xpose.msra.mxu0 %v708
        %712 = vmatprep.subr.mxu0 0.0
        %713 = vmatpush1.xpose.msra.mxu0 0.0
        %714 = vmatprep.subr.mxu0 0.0
        %715 = vmatpush1.xpose.msra.mxu0 0.0
        %716 = vmatprep.subr.mxu0 0.0
        %717 = vmatpush1.xpose.msra.mxu0 0.0
        %718 = vmatprep.subr.mxu0 0.0
        %719 = vmatpush1.xpose.msra.mxu0 0.0
        %720 = vmatprep.subr.mxu0 0.0
        %721 = vmatpush1.xpose.msra.mxu0 0.0
        %722 = vmatprep.subr.mxu0 0.0
        %723 = vmatpush1.xpose.msra.mxu0 0.0
        %724 = vmatprep.subr.mxu0 0.0
        %725 = vmatpush1.xpose.msra.mxu0 0.0
        %726 = vmatprep.subr.mxu0 0.0
        %727 = vmatpush1.xpose.msra.mxu0 0.0
        %728 = vmatprep.subr.mxu0 0.0
        %729 = vmatpush1.xpose.msra.mxu0 0.0
        %730 = vmatprep.subr.mxu0 0.0
        %731 = vmatpush1.xpose.msra.mxu0 0.0
        %732 = vmatprep.subr.mxu0 0.0
        %733 = vmatpush1.xpose.msra.mxu0 0.0
        %734 = vmatprep.subr.mxu0 0.0
        %735 = vmatpush1.xpose.msra.mxu0 0.0
        %736 = vmatprep.subr.mxu0 0.0
        %737 = vmatpush1.xpose.msra.mxu0 0.0
        %738 = vmatprep.subr.mxu0 0.0
        %739 = vmatpush1.xpose.msra.mxu0 0.0
        %740 = vmatprep.subr.mxu0 0.0
        %741 = vmatpush1.xpose.msra.mxu0 0.0
        %742 = vmatprep.subr.mxu0 0.0
        %743 = vmatpush1.xpose.msra.mxu0 0.0
        %744 = vmatprep.subr.mxu0 0.0
        %745 = vmatpush1.xpose.msra.mxu0 0.0
        %746 = vmatprep.subr.mxu0 0.0
        %747 = vmatpush1.xpose.msra.mxu0 0.0
        %748 = vmatprep.subr.mxu0 0.0
        %749 = vmatpush1.xpose.msra.mxu0 0.0
        %750 = vmatprep.subr.mxu0 0.0
        %751 = vmatpush1.xpose.msra.mxu0 0.0
        %752 = vmatprep.subr.mxu0 0.0
        %753 = vmatpush1.xpose.msra.mxu0 0.0
        %754 = vmatprep.subr.mxu0 0.0
        %755 = vmatpush1.xpose.msra.mxu0 0.0
        %756 = vmatprep.subr.mxu0 0.0
        %757 = vmatpush1.xpose.msra.mxu0 0.0
        %758 = vmatprep.subr.mxu0 0.0
        %759 = vmatpush1.xpose.msra.mxu0 0.0
        %760 = vmatprep.subr.mxu0 0.0
        %761 = vmatpush1.xpose.msra.mxu0 0.0
        %762 = vmatprep.subr.mxu0 0.0
        %763 = vmatpush1.xpose.msra.mxu0 0.0
        %764 = vmatprep.subr.mxu0 0.0
        %765 = vmatpush1.xpose.msra.mxu0 0.0
        %766 = vmatprep.subr.mxu0 0.0
        %767 = vmatpush1.xpose.msra.mxu0 0.0
        %768 = vmatprep.subr.mxu0 0.0
        %769 = vmatpush1.xpose.msra.mxu0 0.0
        %770 = vmatprep.subr.mxu0 0.0
        %771 = vmatpush1.xpose.msra.mxu0 0.0
        %772 = vmatprep.subr.mxu0 0.0
        %773 = vmatpush1.xpose.msra.mxu0 0.0
        %774 = vmatprep.mubr.f32.mxu0 0.0
        %775 = vmatmul.mubr.f32.gmra.mrb[0].mxu0 %v706
        %v776 = vpop.f32.mrb[0].mxu0
        %v777 = vadd.f32 0.0, %v776
        %v778 = vpop.f32.mrb[0].mxu0
        %779 = vdwg.mxu0
        %v780 = vmul.f32 %v777, 0.25
        %v782 = vlaneseq
        %v783 = vshrl.u32 %v782, 7
        %v784 = vsub.s32 0, %v783
        %v785 = vrot.slane %v701, %v784
        %v787 = vadd.f32 %v780, %v785
        %vm788 = vcmask 64512
        %v789 = vsel %vm788, %v787, -inf
        %790 = vmax.xlane.f32.xlu0 %v789
        %v791 = vpop.xlane.xlu0 %790
        %v792 = vsub.f32 %v787, %v791
        %v793 = vmul.f32 %v792, 1.442695
        %v794 = vpow.pop %v793
        %v795 = vsel %vm788, %v794, 0.0
        %796 = vadd.xlane.f32.xlu0 %v795
        %v797 = vpop.xlane.xlu0 %796
        %v798 = vrcp.pop %v797
        %v799 = vmul.f32 %v794, %v798
        %800 = vrot.lane.b32.xlu0 %v698, 64
        %v801 = vpop.permute.xlu0 %800
        %v804 = vsel %vm788, %v799, 0
        %806 = vmatprep.subr.mxu0 0.0
        %807 = vmatpush1.msra.mxu0 %v801
        %808 = vmatprep.subr.mxu0 0.0
        %809 = vmatpush1.msra.mxu0 0.0
        %810 = vmatprep.subr.mxu0 0.0
        %811 = vmatpush1.msra.mxu0 0.0
        %812 = vmatprep.subr.mxu0 0.0
        %813 = vmatpush1.msra.mxu0 0.0
        %814 = vmatprep.subr.mxu0 0.0
        %815 = vmatpush1.msra.mxu0 0.0
        %816 = vmatprep.subr.mxu0 0.0
        %817 = vmatpush1.msra.mxu0 0.0
        %818 = vmatprep.subr.mxu0 0.0
        %819 = vmatpush1.msra.mxu0 0.0
        %820 = vmatprep.subr.mxu0 0.0
        %821 = vmatpush1.msra.mxu0 0.0
        %822 = vmatprep.subr.mxu0 0.0
        %823 = vmatpush1.msra.mxu0 0.0
        %824 = vmatprep.subr.mxu0 0.0
        %825 = vmatpush1.msra.mxu0 0.0
        %826 = vmatprep.subr.mxu0 0.0
        %827 = vmatpush1.msra.mxu0 0.0
        %828 = vmatprep.subr.mxu0 0.0
        %829 = vmatpush1.msra.mxu0 0.0
        %830 = vmatprep.subr.mxu0 0.0
        %831 = vmatpush1.msra.mxu0 0.0
        %832 = vmatprep.subr.mxu0 0.0
        %833 = vmatpush1.msra.mxu0 0.0
        %834 = vmatprep.subr.mxu0 0.0
        %835 = vmatpush1.msra.mxu0 0.0
        %836 = vmatprep.subr.mxu0 0.0
        %837 = vmatpush1.msra.mxu0 0.0
        %838 = vmatprep.subr.mxu0 0.0
        %839 = vmatpush1.msra.mxu0 0.0
        %840 = vmatprep.subr.mxu0 0.0
        %841 = vmatpush1.msra.mxu0 0.0
        %842 = vmatprep.subr.mxu0 0.0
        %843 = vmatpush1.msra.mxu0 0.0
        %844 = vmatprep.subr.mxu0 0.0
        %845 = vmatpush1.msra.mxu0 0.0
        %846 = vmatprep.subr.mxu0 0.0
        %847 = vmatpush1.msra.mxu0 0.0
        %848 = vmatprep.subr.mxu0 0.0
        %849 = vmatpush1.msra.mxu0 0.0
        %850 = vmatprep.subr.mxu0 0.0
        %851 = vmatpush1.msra.mxu0 0.0
        %852 = vmatprep.subr.mxu0 0.0
        %853 = vmatpush1.msra.mxu0 0.0
        %854 = vmatprep.subr.mxu0 0.0
        %855 = vmatpush1.msra.mxu0 0.0
        %856 = vmatprep.subr.mxu0 0.0
        %857 = vmatpush1.msra.mxu0 0.0
        %858 = vmatprep.subr.mxu0 0.0
        %859 = vmatpush1.msra.mxu0 0.0
        %860 = vmatprep.subr.mxu0 0.0
        %861 = vmatpush1.msra.mxu0 0.0
        %862 = vmatprep.subr.mxu0 0.0
        %863 = vmatpush1.msra.mxu0 0.0
        %864 = vmatprep.subr.mxu0 0.0
        %865 = vmatpush1.msra.mxu0 0.0
        %866 = vmatprep.subr.mxu0 0.0
        %867 = vmatpush1.msra.mxu0 0.0
        %868 = vmatprep.subr.mxu0 0.0
        %869 = vmatpush1.msra.mxu0 0.0
        %870 = vmatprep.mubr.f32.mxu0 0.0
        %871 = vmatmul.mubr.f32.gmra.mrb[0].mxu0 %v804
        %v872 = vpop.f32.mrb[0].mxu0
        %v873 = vadd.f32 0.0, %v872
        %v874 = vpop.f32.mrb[0].mxu0
        %875 = vdwg.mxu0
        %876 = vst.msk [vmem:[#allocation2] sm:$0xff] %vm705, %v873
        %877 = vrot.lane.b32.xlu0 %v698, 112
        %v878 = vpop.permute.xlu0 %877
        %879 = vrot.lane.b32.xlu0 %v698, 80
        %v880 = vpop.permute.xlu0 %879
        %v881 = vsel %vm705, %v878, 0
        %v883 = vsel %vm705, %v880, 0
        %885 = vmatprep.subr.mxu0 0.0
        %886 = vmatpush1.xpose.msra.mxu0 %v883
        %887 = vmatprep.subr.mxu0 0.0
        %888 = vmatpush1.xpose.msra.mxu0 0.0
        %889 = vmatprep.subr.mxu0 0.0
        %890 = vmatpush1.xpose.msra.mxu0 0.0
        %891 = vmatprep.subr.mxu0 0.0
        %892 = vmatpush1.xpose.msra.mxu0 0.0
        %893 = vmatprep.subr.mxu0 0.0
        %894 = vmatpush1.xpose.msra.mxu0 0.0
        %895 = vmatprep.subr.mxu0 0.0
        %896 = vmatpush1.xpose.msra.mxu0 0.0
        %897 = vmatprep.subr.mxu0 0.0
        %898 = vmatpush1.xpose.msra.mxu0 0.0
        %899 = vmatprep.subr.mxu0 0.0
        %900 = vmatpush1.xpose.msra.mxu0 0.0
        %901 = vmatprep.subr.mxu0 0.0
        %902 = vmatpush1.xpose.msra.mxu0 0.0
        %903 = vmatprep.subr.mxu0 0.0
        %904 = vmatpush1.xpose.msra.mxu0 0.0
        %905 = vmatprep.subr.mxu0 0.0
        %906 = vmatpush1.xpose.msra.mxu0 0.0
        %907 = vmatprep.subr.mxu0 0.0
        %908 = vmatpush1.xpose.msra.mxu0 0.0
        %909 = vmatprep.subr.mxu0 0.0
        %910 = vmatpush1.xpose.msra.mxu0 0.0
        %911 = vmatprep.subr.mxu0 0.0
        %912 = vmatpush1.xpose.msra.mxu0 0.0
        %913 = vmatprep.subr.mxu0 0.0
        %914 = vmatpush1.xpose.msra.mxu0 0.0
        %915 = vmatprep.subr.mxu0 0.0
        %916 = vmatpush1.xpose.msra.mxu0 0.0
        %917 = vmatprep.subr.mxu0 0.0
        %918 = vmatpush1.xpose.msra.mxu0 0.0
        %919 = vmatprep.subr.mxu0 0.0
        %920 = vmatpush1.xpose.msra.mxu0 0.0
        %921 = vmatprep.subr.mxu0 0.0
        %922 = vmatpush1.xpose.msra.mxu0 0.0
        %923 = vmatprep.subr.mxu0 0.0
        %924 = vmatpush1.xpose.msra.mxu0 0.0
        %925 = vmatprep.subr.mxu0 0.0
        %926 = vmatpush1.xpose.msra.mxu0 0.0
        %927 = vmatprep.subr.mxu0 0.0
        %928 = vmatpush1.xpose.msra.mxu0 0.0
        %929 = vmatprep.subr.mxu0 0.0
        %930 = vmatpush1.xpose.msra.mxu0 0.0
        %931 = vmatprep.subr.mxu0 0.0
        %932 = vmatpush1.xpose.msra.mxu0 0.0
        %933 = vmatprep.subr.mxu0 0.0
        %934 = vmatpush1.xpose.msra.mxu0 0.0
        %935 = vmatprep.subr.mxu0 0.0
        %936 = vmatpush1.xpose.msra.mxu0 0.0
        %937 = vmatprep.subr.mxu0 0.0
        %938 = vmatpush1.xpose.msra.mxu0 0.0
        %939 = vmatprep.subr.mxu0 0.0
        %940 = vmatpush1.xpose.msra.mxu0 0.0
        %941 = vmatprep.subr.mxu0 0.0
        %942 = vmatpush1.xpose.msra.mxu0 0.0
        %943 = vmatprep.subr.mxu0 0.0
        %944 = vmatpush1.xpose.msra.mxu0 0.0
        %945 = vmatprep.subr.mxu0 0.0
        %946 = vmatpush1.xpose.msra.mxu0 0.0
        %947 = vmatprep.subr.mxu0 0.0
        %948 = vmatpush1.xpose.msra.mxu0 0.0
        %949 = vmatprep.mubr.f32.mxu0 0.0
        %950 = vmatmul.mubr.f32.gmra.mrb[0].mxu0 %v881
        %v951 = vpop.f32.mrb[0].mxu0
        %v952 = vadd.f32 0.0, %v951
        %v953 = vpop.f32.mrb[0].mxu0
        %954 = vdwg.mxu0
        %v955 = vmul.f32 %v952, 0.25
        %v956 = vadd.f32 %v955, %v785
        %v957 = vsel %vm788, %v956, -inf
        %958 = vmax.xlane.f32.xlu0 %v957
        %v959 = vpop.xlane.xlu0 %958
        %v960 = vsub.f32 %v956, %v959
        %v961 = vmul.f32 %v960, 1.442695
        %v962 = vpow.pop %v961
        %v963 = vsel %vm788, %v962, 0.0
        %964 = vadd.xlane.f32.xlu0 %v963
        %v965 = vpop.xlane.xlu0 %964
        %v966 = vrcp.pop %v965
        %v967 = vmul.f32 %v962, %v966
        %968 = vrot.lane.b32.xlu0 %v698, 48
        %v969 = vpop.permute.xlu0 %968
        %v972 = vsel %vm788, %v967, 0
        %974 = vmatprep.subr.mxu0 0.0
        %975 = vmatpush1.msra.mxu0 %v969
        %976 = vmatprep.subr.mxu0 0.0
        %977 = vmatpush1.msra.mxu0 0.0
        %978 = vmatprep.subr.mxu0 0.0
        %979 = vmatpush1.msra.mxu0 0.0
        %980 = vmatprep.subr.mxu0 0.0
        %981 = vmatpush1.msra.mxu0 0.0
        %982 = vmatprep.subr.mxu0 0.0
        %983 = vmatpush1.msra.mxu0 0.0
        %984 = vmatprep.subr.mxu0 0.0
        %985 = vmatpush1.msra.mxu0 0.0
        %986 = vmatprep.subr.mxu0 0.0
        %987 = vmatpush1.msra.mxu0 0.0
        %988 = vmatprep.subr.mxu0 0.0
        %989 = vmatpush1.msra.mxu0 0.0
        %990 = vmatprep.subr.mxu0 0.0
        %991 = vmatpush1.msra.mxu0 0.0
        %992 = vmatprep.subr.mxu0 0.0
        %993 = vmatpush1.msra.mxu0 0.0
        %994 = vmatprep.subr.mxu0 0.0
        %995 = vmatpush1.msra.mxu0 0.0
        %996 = vmatprep.subr.mxu0 0.0
        %997 = vmatpush1.msra.mxu0 0.0
        %998 = vmatprep.subr.mxu0 0.0
        %999 = vmatpush1.msra.mxu0 0.0
        %1000 = vmatprep.subr.mxu0 0.0
        %1001 = vmatpush1.msra.mxu0 0.0
        %1002 = vmatprep.subr.mxu0 0.0
        %1003 = vmatpush1.msra.mxu0 0.0
        %1004 = vmatprep.subr.mxu0 0.0
        %1005 = vmatpush1.msra.mxu0 0.0
        %1006 = vmatprep.subr.mxu0 0.0
        %1007 = vmatpush1.msra.mxu0 0.0
        %1008 = vmatprep.subr.mxu0 0.0
        %1009 = vmatpush1.msra.mxu0 0.0
        %1010 = vmatprep.subr.mxu0 0.0
        %1011 = vmatpush1.msra.mxu0 0.0
        %1012 = vmatprep.subr.mxu0 0.0
        %1013 = vmatpush1.msra.mxu0 0.0
        %1014 = vmatprep.subr.mxu0 0.0
        %1015 = vmatpush1.msra.mxu0 0.0
        %1016 = vmatprep.subr.mxu0 0.0
        %1017 = vmatpush1.msra.mxu0 0.0
        %1018 = vmatprep.subr.mxu0 0.0
        %1019 = vmatpush1.msra.mxu0 0.0
        %1020 = vmatprep.subr.mxu0 0.0
        %1021 = vmatpush1.msra.mxu0 0.0
        %1022 = vmatprep.subr.mxu0 0.0
        %1023 = vmatpush1.msra.mxu0 0.0
        %1024 = vmatprep.subr.mxu0 0.0
        %1025 = vmatpush1.msra.mxu0 0.0
        %1026 = vmatprep.subr.mxu0 0.0
        %1027 = vmatpush1.msra.mxu0 0.0
        %1028 = vmatprep.subr.mxu0 0.0
        %1029 = vmatpush1.msra.mxu0 0.0
        %1030 = vmatprep.subr.mxu0 0.0
        %1031 = vmatpush1.msra.mxu0 0.0
        %1032 = vmatprep.subr.mxu0 0.0
        %1033 = vmatpush1.msra.mxu0 0.0
        %1034 = vmatprep.subr.mxu0 0.0
        %1035 = vmatpush1.msra.mxu0 0.0
        %1036 = vmatprep.subr.mxu0 0.0
        %1037 = vmatpush1.msra.mxu0 0.0
        %1038 = vmatprep.mubr.f32.mxu0 0.0
        %1039 = vmatmul.mubr.f32.gmra.mrb[0].mxu0 %v972
        %v1040 = vpop.f32.mrb[0].mxu0
        %v1041 = vadd.f32 0.0, %v1040
        %v1042 = vpop.f32.mrb[0].mxu0
        %1043 = vdwg.mxu0
        %1045 = vrot.lane.b32.xlu0 %v1041, 16
        %v1046 = vpop.permute.xlu0 %1045
        %vm1048 = vcmask 261248
        %1049 = vst.msk [vmem:[#allocation2] sm:$0xff] %vm1048, %v1046
        %v1050 = vld [vmem:[#allocation2] sm:$0xff]
        %v1051 = vld [vmem:[%s6] sm:$0xff]
        %v1052 = vld [vmem:[%s6 + $0x8] sm:$0xff]
        %v1053 = vld [vmem:[%s6 + $0x10] sm:$0xff]
        %v1054 = vld [vmem:[%s6 + $0x18] sm:$0xff]
        %v1055 = vld [vmem:[%s7] sm:$0x1]
        %v1057 = vlaneseq
        %v1058 = vshrl.u32 %v1057, 7
        %v1059 = vsub.s32 0, %v1058
        %v1060 = vrot.slane %v1055, %v1059
        %v1063 = vsel %vm588, %v1050, 0
        %1065 = vmatprep.subr.mxu0 0.0
        %1066 = vmatpush1.msra.mxu0 %v1051
        %1067 = vmatprep.subr.mxu0 0.0
        %1068 = vmatpush1.msra.mxu0 %v1052
        %1069 = vmatprep.subr.mxu0 0.0
        %1070 = vmatpush1.msra.mxu0 %v1053
        %1071 = vmatprep.subr.mxu0 0.0
        %1072 = vmatpush1.msra.mxu0 %v1054
        %1073 = vmatprep.subr.mxu0 0.0
        %1074 = vmatpush1.msra.mxu0 0.0
        %1075 = vmatprep.subr.mxu0 0.0
        %1076 = vmatpush1.msra.mxu0 0.0
        %1077 = vmatprep.subr.mxu0 0.0
        %1078 = vmatpush1.msra.mxu0 0.0
        %1079 = vmatprep.subr.mxu0 0.0
        %1080 = vmatpush1.msra.mxu0 0.0
        %1081 = vmatprep.subr.mxu0 0.0
        %1082 = vmatpush1.msra.mxu0 0.0
        %1083 = vmatprep.subr.mxu0 0.0
        %1084 = vmatpush1.msra.mxu0 0.0
        %1085 = vmatprep.subr.mxu0 0.0
        %1086 = vmatpush1.msra.mxu0 0.0
        %1087 = vmatprep.subr.mxu0 0.0
        %1088 = vmatpush1.msra.mxu0 0.0
        %1089 = vmatprep.subr.mxu0 0.0
        %1090 = vmatpush1.msra.mxu0 0.0
        %1091 = vmatprep.subr.mxu0 0.0
        %1092 = vmatpush1.msra.mxu0 0.0
        %1093 = vmatprep.subr.mxu0 0.0
        %1094 = vmatpush1.msra.mxu0 0.0
        %1095 = vmatprep.subr.mxu0 0.0
        %1096 = vmatpush1.msra.mxu0 0.0
        %1097 = vmatprep.subr.mxu0 0.0
        %1098 = vmatpush1.msra.mxu0 0.0
        %1099 = vmatprep.subr.mxu0 0.0
        %1100 = vmatpush1.msra.mxu0 0.0
        %1101 = vmatprep.subr.mxu0 0.0
        %1102 = vmatpush1.msra.mxu0 0.0
        %1103 = vmatprep.subr.mxu0 0.0
        %1104 = vmatpush1.msra.mxu0 0.0
        %1105 = vmatprep.subr.mxu0 0.0
        %1106 = vmatpush1.msra.mxu0 0.0
        %1107 = vmatprep.subr.mxu0 0.0
        %1108 = vmatpush1.msra.mxu0 0.0
        %1109 = vmatprep.subr.mxu0 0.0
        %1110 = vmatpush1.msra.mxu0 0.0
        %1111 = vmatprep.subr.mxu0 0.0
        %1112 = vmatpush1.msra.mxu0 0.0
        %1113 = vmatprep.subr.mxu0 0.0
        %1114 = vmatpush1.msra.mxu0 0.0
        %1115 = vmatprep.subr.mxu0 0.0
        %1116 = vmatpush1.msra.mxu0 0.0
        %1117 = vmatprep.subr.mxu0 0.0
        %1118 = vmatpush1.msra.mxu0 0.0
        %1119 = vmatprep.subr.mxu0 0.0
        %1120 = vmatpush1.msra.mxu0 0.0
        %1121 = vmatprep.subr.mxu0 0.0
        %1122 = vmatpush1.msra.mxu0 0.0
        %1123 = vmatprep.subr.mxu0 0.0
        %1124 = vmatpush1.msra.mxu0 0.0
        %1125 = vmatprep.subr.mxu0 0.0
        %1126 = vmatpush1.msra.mxu0 0.0
        %1127 = vmatprep.subr.mxu0 0.0
        %1128 = vmatpush1.msra.mxu0 0.0
        %1129 = vmatprep.mubr.f32.mxu0 0.0
        %1130 = vmatmul.mubr.f32.gmra.mrb[0].mxu0 %v1063
        %v1131 = vpop.f32.mrb[0].mxu0
        %v1132 = vadd.f32 %v1060, %v1131
        %v1133 = vpop.f32.mrb[0].mxu0
        %1134 = vdwg.mxu0
        %v1135 = vadd.f32 %v1132, %v616
        %v1136 = vld [vmem:[%s8] sm:$0x1]
        %v1137 = vld [vmem:[%s9] sm:$0x1]
        %v1138 = vsel %vm588, %v1135, 0.0
        %1139 = vadd.xlane.f32.xlu0 %v1138
        %v1140 = vpop.xlane.xlu0 %1139
        %v1141 = vmul.f32 %v1140, %v592
        %v1142 = vsub.f32 %v1135, %v1141
        %v1143 = vmul.f32 %v1142, %v1142
        %v1144 = vsel %vm588, %v1143, 0.0
        %1145 = vadd.xlane.f32.xlu0 %v1144
        %v1146 = vpop.xlane.xlu0 %1145
        %v1147 = vmul.f32 %v1146, %v592
        %v1148 = vadd.f32 %v1147, 1e-12
        %v1149 = vrsqrt.pop %v1148
        %v1150 = vmul.f32 %v1142, %v1149
        %v1152 = vlaneseq
        %v1153 = vshrl.u32 %v1152, 7
        %v1154 = vsub.s32 0, %v1153
        %v1155 = vrot.slane %v1136, %v1154
        %v1157 = vmul.f32 %v1150, %v1155
        %v1159 = vlaneseq
        %v1160 = vshrl.u32 %v1159, 7
        %v1161 = vsub.s32 0, %v1160
        %v1162 = vrot.slane %v1137, %v1161
        %v1164 = vadd.f32 %v1157, %v1162
        %v1165 = vld [vmem:[%s10] sm:$0xff]
        %v1166 = vld [vmem:[%s10 + $0x8] sm:$0xff]
        %v1167 = vld [vmem:[%s10 + $0x10] sm:$0xff]
        %v1168 = vld [vmem:[%s10 + $0x18] sm:$0xff]
        %v1169 = vld [vmem:[%s11] sm:$0x1]
        %v1171 = vlaneseq
        %v1172 = vshrl.u32 %v1171, 7
        %v1173 = vsub.s32 0, %v1172
        %v1174 = vrot.slane %v1169, %v1173
        %v1177 = vsel %vm588, %v1164, 0
        %1179 = vmatprep.subr.mxu0 0.0
        %1180 = vmatpush1.msra.mxu0 %v1165
        %1181 = vmatprep.subr.mxu0 0.0
        %1182 = vmatpush1.msra.mxu0 %v1166
        %1183 = vmatprep.subr.mxu0 0.0
        %1184 = vmatpush1.msra.mxu0 %v1167
        %1185 = vmatprep.subr.mxu0 0.0
        %1186 = vmatpush1.msra.mxu0 %v1168
        %1187 = vmatprep.subr.mxu0 0.0
        %1188 = vmatpush1.msra.mxu0 0.0
        %1189 = vmatprep.subr.mxu0 0.0
        %1190 = vmatpush1.msra.mxu0 0.0
        %1191 = vmatprep.subr.mxu0 0.0
        %1192 = vmatpush1.msra.mxu0 0.0
        %1193 = vmatprep.subr.mxu0 0.0
        %1194 = vmatpush1.msra.mxu0 0.0
        %1195 = vmatprep.subr.mxu0 0.0
        %1196 = vmatpush1.msra.mxu0 0.0
        %1197 = vmatprep.subr.mxu0 0.0
        %1198 = vmatpush1.msra.mxu0 0.0
        %1199 = vmatprep.subr.mxu0 0.0
        %1200 = vmatpush1.msra.mxu0 0.0
        %1201 = vmatprep.subr.mxu0 0.0
        %1202 = vmatpush1.msra.mxu0 0.0
        %1203 = vmatprep.subr.mxu0 0.0
        %1204 = vmatpush1.msra.mxu0 0.0
        %1205 = vmatprep.subr.mxu0 0.0
        %1206 = vmatpush1.msra.mxu0 0.0
        %1207 = vmatprep.subr.mxu0 0.0
        %1208 = vmatpush1.msra.mxu0 0.0
        %1209 = vmatprep.subr.mxu0 0.0
        %1210 = vmatpush1.msra.mxu0 0.0
        %1211 = vmatprep.subr.mxu0 0.0
        %1212 = vmatpush1.msra.mxu0 0.0
        %1213 = vmatprep.subr.mxu0 0.0
        %1214 = vmatpush1.msra.mxu0 0.0
        %1215 = vmatprep.subr.mxu0 0.0
        %1216 = vmatpush1.msra.mxu0 0.0
        %1217 = vmatprep.subr.mxu0 0.0
        %1218 = vmatpush1.msra.mxu0 0.0
        %1219 = vmatprep.subr.mxu0 0.0
        %1220 = vmatpush1.msra.mxu0 0.0
        %1221 = vmatprep.subr.mxu0 0.0
        %1222 = vmatpush1.msra.mxu0 0.0
        %1223 = vmatprep.subr.mxu0 0.0
        %1224 = vmatpush1.msra.mxu0 0.0
        %1225 = vmatprep.subr.mxu0 0.0
        %1226 = vmatpush1.msra.mxu0 0.0
        %1227 = vmatprep.subr.mxu0 0.0
        %1228 = vmatpush1.msra.mxu0 0.0
        %1229 = vmatprep.subr.mxu0 0.0
        %1230 = vmatpush1.msra.mxu0 0.0
        %1231 = vmatprep.subr.mxu0 0.0
        %1232 = vmatpush1.msra.mxu0 0.0
        %1233 = vmatprep.subr.mxu0 0.0
        %1234 = vmatpush1.msra.mxu0 0.0
        %1235 = vmatprep.subr.mxu0 0.0
        %1236 = vmatpush1.msra.mxu0 0.0
        %1237 = vmatprep.subr.mxu0 0.0
        %1238 = vmatpush1.msra.mxu0 0.0
        %1239 = vmatprep.subr.mxu0 0.0
        %1240 = vmatpush1.msra.mxu0 0.0
        %1241 = vmatprep.subr.mxu0 0.0
        %1242 = vmatpush1.msra.mxu0 0.0
        %1243 = vmatprep.mubr.f32.mxu0 0.0
        %1244 = vmatmul.mubr.f32.gmra.mrb[0].mxu0 %v1177
        %v1245 = vpop.f32.mrb[0].mxu0
        %v1246 = vadd.f32 %v1174, %v1245
        %v1247 = vpop.f32.mrb[0].mxu0
        %1248 = vdwg.mxu0
        %v1249 = vmul.f32 %v1246, 0.5
        %v1250 = vmul.f32 %v1246, 0.044715
        %v1251 = vmul.f32 %v1250, %v1246
        %v1252 = vmul.f32 %v1251, %v1246
        %v1253 = vadd.f32 %v1246, %v1252
        %v1254 = vmul.f32 %v1253, 0.7978846
        %v1255 = vtanh.pop %v1254
        %v1256 = vadd.f32 %v1255, 1.0
        %v1257 = vmul.f32 %v1249, %v1256
        %v1258 = vld [vmem:[%s12] sm:$0xff]
        %v1259 = vld [vmem:[%s12 + $0x8] sm:$0xff]
        %v1260 = vld [vmem:[%s12 + $0x10] sm:$0xff]
        %v1261 = vld [vmem:[%s12 + $0x18] sm:$0xff]
        %v1262 = vld [vmem:[%s12 + $0x20] sm:$0xff]
        %v1263 = vld [vmem:[%s12 + $0x28] sm:$0xff]
        %v1264 = vld [vmem:[%s12 + $0x30] sm:$0xff]
        %v1265 = vld [vmem:[%s12 + $0x38] sm:$0xff]
        %v1266 = vld [vmem:[%s12 + $0x40] sm:$0xff]
        %v1267 = vld [vmem:[%s12 + $0x48] sm:$0xff]
        %v1268 = vld [vmem:[%s12 + $0x50] sm:$0xff]
        %v1269 = vld [vmem:[%s12 + $0x58] sm:$0xff]
        %v1270 = vld [vmem:[%s12 + $0x60] sm:$0xff]
        %v1271 = vld [vmem:[%s12 + $0x68] sm:$0xff]
        %v1272 = vld [vmem:[%s12 + $0x70] sm:$0xff]
        %v1273 = vld [vmem:[%s12 + $0x78] sm:$0xff]
        %v1274 = vld [vmem:[%s13] sm:$0x1]
        %v1276 = vlaneseq
        %v1277 = vshrl.u32 %v1276, 7
        %v1278 = vsub.s32 0, %v1277
        %v1279 = vrot.slane %v1274, %v1278
        %1281 = vmatprep.subr.mxu0 0.0
        %1282 = vmatpush1.msra.mxu0 %v1258
        %1283 = vmatprep.subr.mxu0 0.0
        %1284 = vmatpush1.msra.mxu0 %v1259
        %1285 = vmatprep.subr.mxu0 0.0
        %1286 = vmatpush1.msra.mxu0 %v1260
        %1287 = vmatprep.subr.mxu0 0.0
        %1288 = vmatpush1.msra.mxu0 %v1261
        %1289 = vmatprep.subr.mxu0 0.0
        %1290 = vmatpush1.msra.mxu0 %v1262
        %1291 = vmatprep.subr.mxu0 0.0
        %1292 = vmatpush1.msra.mxu0 %v1263
        %1293 = vmatprep.subr.mxu0 0.0
        %1294 = vmatpush1.msra.mxu0 %v1264
        %1295 = vmatprep.subr.mxu0 0.0
        %1296 = vmatpush1.msra.mxu0 %v1265
        %1297 = vmatprep.subr.mxu0 0.0
        %1298 = vmatpush1.msra.mxu0 %v1266
        %1299 = vmatprep.subr.mxu0 0.0
        %1300 = vmatpush1.msra.mxu0 %v1267
        %1301 = vmatprep.subr.mxu0 0.0
        %1302 = vmatpush1.msra.mxu0 %v1268
        %1303 = vmatprep.subr.mxu0 0.0
        %1304 = vmatpush1.msra.mxu0 %v1269
        %1305 = vmatprep.subr.mxu0 0.0
        %1306 = vmatpush1.msra.mxu0 %v1270
        %1307 = vmatprep.subr.mxu0 0.0
        %1308 = vmatpush1.msra.mxu0 %v1271
        %1309 = vmatprep.subr.mxu0 0.0
        %1310 = vmatpush1.msra.mxu0 %v1272
        %1311 = vmatprep.subr.mxu0 0.0
        %1312 = vmatpush1.msra.mxu0 %v1273
        %1313 = vmatprep.subr.mxu0 0.0
        %1314 = vmatpush1.msra.mxu0 0.0
        %1315 = vmatprep.subr.mxu0 0.0
        %1316 = vmatpush1.msra.mxu0 0.0
        %1317 = vmatprep.subr.mxu0 0.0
        %1318 = vmatpush1.msra.mxu0 0.0
        %1319 = vmatprep.subr.mxu0 0.0
        %1320 = vmatpush1.msra.mxu0 0.0
        %1321 = vmatprep.subr.mxu0 0.0
        %1322 = vmatpush1.msra.mxu0 0.0
        %1323 = vmatprep.subr.mxu0 0.0
        %1324 = vmatpush1.msra.mxu0 0.0
        %1325 = vmatprep.subr.mxu0 0.0
        %1326 = vmatpush1.msra.mxu0 0.0
        %1327 = vmatprep.subr.mxu0 0.0
        %1328 = vmatpush1.msra.mxu0 0.0
        %1329 = vmatprep.subr.mxu0 0.0
        %1330 = vmatpush1.msra.mxu0 0.0
        %1331 = vmatprep.subr.mxu0 0.0
        %1332 = vmatpush1.msra.mxu0 0.0
        %1333 = vmatprep.subr.mxu0 0.0
        %1334 = vmatpush1.msra.mxu0 0.0
        %1335 = vmatprep.subr.mxu0 0.0
        %1336 = vmatpush1.msra.mxu0 0.0
        %1337 = vmatprep.subr.mxu0 0.0
        %1338 = vmatpush1.msra.mxu0 0.0
        %1339 = vmatprep.subr.mxu0 0.0
        %1340 = vmatpush1.msra.mxu0 0.0
        %1341 = vmatprep.subr.mxu0 0.0
        %1342 = vmatpush1.msra.mxu0 0.0
        %1343 = vmatprep.subr.mxu0 0.0
        %1344 = vmatpush1.msra.mxu0 0.0
        %1345 = vmatprep.mubr.f32.mxu0 0.0
        %1346 = vmatmul.mubr.f32.gmra.mrb[0].mxu0 %v1257
        %v1347 = vpop.f32.mrb[0].mxu0
        %v1348 = vadd.f32 %v1279, %v1347
        %v1349 = vpop.f32.mrb[0].mxu0
        %1350 = vdwg.mxu0
        %v1351 = vadd.f32 %v1348, %v1164
        %v1352 = vld [vmem:[%s14] sm:$0x1]
        %v1353 = vld [vmem:[%s15] sm:$0x1]
        %v1354 = vsel %vm588, %v1351, 0.0
        %1355 = vadd.xlane.f32.xlu0 %v1354
        %v1356 = vpop.xlane.xlu0 %1355
        %v1357 = vmul.f32 %v1356, %v592
        %v1358 = vsub.f32 %v1351, %v1357
        %v1359 = vmul.f32 %v1358, %v1358
        %v1360 = vsel %vm588, %v1359, 0.0
        %1361 = vadd.xlane.f32.xlu0 %v1360
        %v1362 = vpop.xlane.xlu0 %1361
        %v1363 = vmul.f32 %v1362, %v592
        %v1364 = vadd.f32 %v1363, 1e-12
        %v1365 = vrsqrt.pop %v1364
        %v1366 = vmul.f32 %v1358, %v1365
        %v1368 = vlaneseq
        %v1369 = vshrl.u32 %v1368, 7
        %v1370 = vsub.s32 0, %v1369
        %v1371 = vrot.slane %v1352, %v1370
        %v1373 = vmul.f32 %v1366, %v1371
        %v1375 = vlaneseq
        %v1376 = vshrl.u32 %v1375, 7
        %v1377 = vsub.s32 0, %v1376
        %v1378 = vrot.slane %v1353, %v1377
        %v1380 = vadd.f32 %v1373, %v1378
        %v1381 = vld [vmem:[%s16] sm:$0xff]
        %v1382 = vld [vmem:[%s16 + $0x8] sm:$0xff]
        %v1383 = vld [vmem:[%s16 + $0x10] sm:$0xff]
        %v1384 = vld [vmem:[%s16 + $0x18] sm:$0xff]
        %v1385 = vld [vmem:[%s17] sm:$0x1]
        %v1387 = vlaneseq
        %v1388 = vshrl.u32 %v1387, 7
        %v1389 = vsub.s32 0, %v1388
        %v1390 = vrot.slane %v1385, %v1389
        %v1393 = vsel %vm588, %v1380, 0
        %1395 = vmatprep.subr.mxu0 0.0
        %1396 = vmatpush1.msra.mxu0 %v1381
        %1397 = vmatprep.subr.mxu0 0.0
        %1398 = vmatpush1.msra.mxu0 %v1382
        %1399 = vmatprep.subr.mxu0 0.0
        %1400 = vmatpush1.msra.mxu0 %v1383
        %1401 = vmatprep.subr.mxu0 0.0
        %1402 = vmatpush1.msra.mxu0 %v1384
        %1403 = vmatprep.subr.mxu0 0.0
        %1404 = vmatpush1.msra.mxu0 0.0
        %1405 = vmatprep.subr.mxu0 0.0
        %1406 = vmatpush1.msra.mxu0 0.0
        %1407 = vmatprep.subr.mxu0 0.0
        %1408 = vmatpush1.msra.mxu0 0.0
        %1409 = vmatprep.subr.mxu0 0.0
        %1410 = vmatpush1.msra.mxu0 0.0
        %1411 = vmatprep.subr.mxu0 0.0
        %1412 = vmatpush1.msra.mxu0 0.0
        %1413 = vmatprep.subr.mxu0 0.0
        %1414 = vmatpush1.msra.mxu0 0.0
        %1415 = vmatprep.subr.mxu0 0.0
        %1416 = vmatpush1.msra.mxu0 0.0
        %1417 = vmatprep.subr.mxu0 0.0
        %1418 = vmatpush1.msra.mxu0 0.0
        %1419 = vmatprep.subr.mxu0 0.0
        %1420 = vmatpush1.msra.mxu0 0.0
        %1421 = vmatprep.subr.mxu0 0.0
        %1422 = vmatpush1.msra.mxu0 0.0
        %1423 = vmatprep.subr.mxu0 0.0
        %1424 = vmatpush1.msra.mxu0 0.0
        %1425 = vmatprep.subr.mxu0 0.0
        %1426 = vmatpush1.msra.mxu0 0.0
        %1427 = vmatprep.subr.mxu0 0.0
        %1428 = vmatpush1.msra.mxu0 0.0
        %1429 = vmatprep.subr.mxu0 0.0
        %1430 = vmatpush1.msra.mxu0 0.0
        %1431 = vmatprep.subr.mxu0 0.0
        %1432 = vmatpush1.msra.mxu0 0.0
        %1433 = vmatprep.subr.mxu0 0.0
        %1434 = vmatpush1.msra.mxu0 0.0
        %1435 = vmatprep.subr.mxu0 0.0
        %1436 = vmatpush1.msra.mxu0 0.0
        %1437 = vmatprep.subr.mxu0 0.0
        %1438 = vmatpush1.msra.mxu0 0.0
        %1439 = vmatprep.subr.mxu0 0.0
        %1440 = vmatpush1.msra.mxu0 0.0
        %1441 = vmatprep.subr.mxu0 0.0
        %1442 = vmatpush1.msra.mxu0 0.0
        %1443 = vmatprep.subr.mxu0 0.0
        %1444 = vmatpush1.msra.mxu0 0.0
        %1445 = vmatprep.subr.mxu0 0.0
        %1446 = vmatpush1.msra.mxu0 0.0
        %1447 = vmatprep.subr.mxu0 0.0
        %1448 = vmatpush1.msra.mxu0 0.0
        %1449 = vmatprep.subr.mxu0 0.0
        %1450 = vmatpush1.msra.mxu0 0.0
        %1451 = vmatprep.subr.mxu0 0.0
        %1452 = vmatpush1.msra.mxu0 0.0
        %1453 = vmatprep.subr.mxu0 0.0
        %1454 = vmatpush1.msra.mxu0 0.0
        %1455 = vmatprep.subr.mxu0 0.0
        %1456 = vmatpush1.msra.mxu0 0.0
        %1457 = vmatprep.subr.mxu0 0.0
        %1458 = vmatpush1.msra.mxu0 0.0
        %1459 = vmatprep.mubr.f32.mxu0 0.0
        %1460 = vmatmul.mubr.f32.gmra.mrb[0].mxu0 %v1393
        %v1461 = vpop.f32.mrb[0].mxu0
        %v1462 = vadd.f32 %v1390, %v1461
        %v1463 = vpop.f32.mrb[0].mxu0
        %1464 = vdwg.mxu0
        %1465 = vst [vmem:[%s577] sm:$0xff] %v1462
        %s1466 = sand.u32 %s428, 1
        %s1467 = scalar_lea.sflag [#allocation4], %s1466
        %s1468 = sand.u32 %s428, 1
        %s1469 = smul.addr %s1468, 8
        %s1470 = scalar_lea.vmem [#allocation3], %s1469
        // Predicated region
        $region93: #{tpu_custom_call.1} parent=91 // pred_check
          %p1471 = pneg %p438
        $region94: #{tpu_custom_call.1} parent=91 // pred_check_branch
          %1473 = sbr.rel (%p1471) target = $region96
        $region95: #{tpu_custom_call.1} parent=91 // pred_region
          %s1475 = ssub.s32 128, 128
          %1476 = vsyncadd %s1467, %s1475
          %s1477 = smul.addr %s32, 128
          %s1478 = scalar_lea.hbm %s18, %s1477
          %s1480 = sshll.u32 %s1470, 4
          %s1481 = int_to_ptr.vmem [resolvable:$true] %s1480
          %1483 = dma.vmem_to_hbm [thread:$0]  %s1481, 128, %s1478, %s1467
        $region96: #{tpu_custom_call.1} parent=91 // pred_fallthru
          _
      $region92: #{tpu_custom_call.1} parent=5 // pred_fallthru
        _
      %p1484 = scmp.le.s32.totalorder 2, %s27
      // Predicated region
      $region97: #{tpu_custom_call.1} parent=5 // pred_check
        %p1485 = pneg %p1484
      $region98: #{tpu_custom_call.1} parent=5 // pred_check_branch
        %1487 = sbr.rel (%p1485) target = $region100
      $region99: #{tpu_custom_call.1} parent=5 // pred_region
        %s1488 = ssub.s32 %s27, 2
        // Predicated region
        $region101: #{tpu_custom_call.1} parent=99 // pred_check
          %p1489 = pneg %p444
        $region102: #{tpu_custom_call.1} parent=99 // pred_check_branch
          %1491 = sbr.rel (%p1489) target = $region104
        $region103: #{tpu_custom_call.1} parent=99 // pred_region
          %s1492 = sand.u32 %s429, 1
          %s1493 = scalar_lea.sflag [#allocation4], %s1492
          %s1494 = sand.u32 %s429, 1
          %s1495 = smul.addr %s1494, 8
          %s1496 = scalar_lea.vmem [#allocation3], %s1495
          %1497 = dma.done %s1493, 128
        $region104: #{tpu_custom_call.1} parent=99 // pred_fallthru
          _
      $region100: #{tpu_custom_call.1} parent=5 // pred_fallthru
        _
    $region6: #{tpu_custom_call.1} parent=1 // loop_footer
      %s31 = sadd.s32 1, %s27
    $region7: #{tpu_custom_call.1} parent=1 // loop_footer_branch
      %26 = sbr.rel target = $region3
    $region8: #{tpu_custom_call.1} parent=1 // loop_exit
      _
    %1498 = vsyncpa [#allocation4], 1
    %s1499 = scalar_lea.sflag [#allocation4], 1
    %1500 = vsyncpa %s1499, 1

</llo_original>
